<compile_context>
chip_gen: v6e
topology: v6e:2x2x1
jax: 0.10.0
libtpu: 0.0.40
codegen_flags: <defaults>
</compile_context>

<pallas_src>
import functools

import jax
import jax.numpy as jnp
from jax.experimental import pallas as pl
from jax.experimental.pallas import tpu as pltpu


def _conv_bn_kernel(x_ref, w_ref, scale_ref, shift_ref, o_ref, *,
                    KH, KW, stride, dilation, TOH, OW, Cin, Cout):
    """One (batch, output-row-tile) grid step.

    x_ref:     (1, Hp, Wp_pad, Cin)  zero-padded NHWC input, full image of this batch
    w_ref:     (KH, KW, Cin, Cout)   conv weights (HWIO)
    scale_ref: (1, Cout)             folded BN scale = gamma / sqrt(var + eps)
    shift_ref: (1, Cout)             folded BN shift = beta - mean * scale
    o_ref:     (1, TOH, OW, Cout)    output row tile
    """
    r = pl.program_id(1)
    row0 = pl.multiple_of(r * (TOH * stride), TOH * stride)

    rows = (TOH - 1) * stride + 1     # input rows touched by this tile (per tap)
    cols = (OW - 1) * stride + 1      # input cols touched (per tap)

    acc = jnp.zeros((TOH * OW, Cout), jnp.float32)
    # static tap loops -> KH*KW MXU matmuls accumulated in f32
    for kh in range(KH):
        for kw in range(KW):
            win = x_ref[0,
                        pl.ds(row0 + kh * dilation, rows),
                        pl.ds(kw * dilation, cols),
                        :]                              # (rows, cols, Cin)
            if stride != 1:
                win = win[::stride, ::stride, :]        # static subsample for strided conv
            acc = acc + jnp.dot(win.reshape(TOH * OW, Cin), w_ref[kh, kw],
                                preferred_element_type=jnp.float32)

    y = acc * scale_ref[...] + shift_ref[...]           # fused (eval-mode) BatchNorm
    o_ref[0] = y.reshape(TOH, OW, Cout).astype(o_ref.dtype)


def basic_conv2d_pallas(x, conv_w, bn_gamma, bn_beta, bn_mean, bn_var, *,
                        stride=1, padding=0, dilation=1, eps=1e-5):
    """x: (B, Cin, H, W) NCHW; conv_w: (Cout, Cin, KH, KW) (PyTorch OIHW).
    Returns (B, Cout, OH, OW) = BatchNorm2d(Conv2d(x, bias=False)), eval-mode BN."""
    B, Cin, H, W = x.shape
    Cout, Cin_w, KH, KW = conv_w.shape
    assert Cin == Cin_w

    OH = (H + 2 * padding - dilation * (KH - 1) - 1) // stride + 1
    OW = (W + 2 * padding - dilation * (KW - 1) - 1) // stride + 1

    # glue: NCHW -> NHWC, zero-pad spatially (Conv2d zero padding; BN comes after conv)
    x_nhwc = jnp.transpose(x, (0, 2, 3, 1)).astype(jnp.float32)
    x_pad = jnp.pad(x_nhwc, ((0, 0), (padding, padding), (padding, padding), (0, 0)))
    Hp, Wp = x_pad.shape[1], x_pad.shape[2]
    # pad width to a multiple of 8 (sublane friendliness); extra zero cols are never read
    Wp_pad = ((Wp + 7) // 8) * 8
    if Wp_pad != Wp:
        x_pad = jnp.pad(x_pad, ((0, 0), (0, 0), (0, Wp_pad - Wp), (0, 0)))

    # OIHW -> HWIO so the kernel contracts (pixels, Cin) @ (Cin, Cout) on the MXU
    w_hwio = jnp.transpose(conv_w, (2, 3, 1, 0)).astype(jnp.float32)

    # fold eval-mode BatchNorm into per-channel scale/shift (applied in-kernel)
    scale = (bn_gamma / jnp.sqrt(bn_var + eps)).astype(jnp.float32)
    shift = (bn_beta - bn_mean * scale).astype(jnp.float32)
    scale2 = scale.reshape(1, Cout)
    shift2 = shift.reshape(1, Cout)

    # tile output rows so the grid has B * (OH/TOH) steps for pipelining / megacore
    TOH = 8 if OH % 8 == 0 else OH
    n_row_tiles = OH // TOH

    kernel = functools.partial(_conv_bn_kernel, KH=KH, KW=KW, stride=stride,
                               dilation=dilation, TOH=TOH, OW=OW, Cin=Cin, Cout=Cout)

    out_nhwc = pl.pallas_call(
        kernel,
        out_shape=jax.ShapeDtypeStruct((B, OH, OW, Cout), jnp.float32),
        grid=(B, n_row_tiles),
        in_specs=[
            pl.BlockSpec((1, Hp, Wp_pad, Cin), lambda b, r: (b, 0, 0, 0)),  # padded image
            pl.BlockSpec((KH, KW, Cin, Cout), lambda b, r: (0, 0, 0, 0)),   # conv weights
            pl.BlockSpec((1, Cout), lambda b, r: (0, 0)),                   # BN scale
            pl.BlockSpec((1, Cout), lambda b, r: (0, 0)),                   # BN shift
        ],
        out_specs=pl.BlockSpec((1, TOH, OW, Cout), lambda b, r: (b, r, 0, 0)),
        compiler_params=pltpu.CompilerParams(
            dimension_semantics=("parallel", "parallel")),
    )(x_pad, w_hwio, scale2, shift2)

    # glue: NHWC -> NCHW
    return jnp.transpose(out_nhwc, (0, 3, 1, 2))


def basic_conv2d_ref(x, conv_w, bn_gamma, bn_beta, bn_mean, bn_var, *,
                     stride=1, padding=0, dilation=1, eps=1e-5):
    """Pure-JAX reference mirroring the PyTorch forward (conv -> BN, no ReLU)."""
    y = jax.lax.conv_general_dilated(
        x, conv_w,
        window_strides=(stride, stride),
        padding=[(padding, padding), (padding, padding)],
        rhs_dilation=(dilation, dilation),
        dimension_numbers=("NCHW", "OIHW", "NCHW"),
        precision=jax.lax.Precision.HIGHEST)
    scale = bn_gamma / jnp.sqrt(bn_var + eps)
    shift = bn_beta - bn_mean * scale
    return y * scale[None, :, None, None] + shift[None, :, None, None]


if __name__ == "__main__":
    B, Cin, H, W = 2, 16, 16, 16
    Cout, K = 32, 3
    stride, padding, dilation = 1, 1, 1

    key = jax.random.PRNGKey(0)
    kx, kw, kg, kb, km, kv = jax.random.split(key, 6)

    x = jax.random.normal(kx, (B, Cin, H, W), dtype=jnp.float32)
    conv_w = jax.random.normal(kw, (Cout, Cin, K, K), dtype=jnp.float32) * 0.1
    # BatchNorm2d affine params + running statistics (eval mode), nontrivial values
    bn_gamma = 1.0 + 0.1 * jax.random.normal(kg, (Cout,), dtype=jnp.float32)
    bn_beta = 0.1 * jax.random.normal(kb, (Cout,), dtype=jnp.float32)
    bn_mean = 0.1 * jax.random.normal(km, (Cout,), dtype=jnp.float32)
    bn_var = jnp.abs(jax.random.normal(kv, (Cout,), dtype=jnp.float32)) + 0.5

    y = basic_conv2d_pallas(x, conv_w, bn_gamma, bn_beta, bn_mean, bn_var,
                            stride=stride, padding=padding, dilation=dilation)
    jax.block_until_ready(y)

    y_ref = basic_conv2d_ref(x, conv_w, bn_gamma, bn_beta, bn_mean, bn_var,
                             stride=stride, padding=padding, dilation=dilation)
    assert y.shape == (B, Cout, H, W)
    assert jnp.allclose(y, y_ref, atol=1e-3, rtol=1e-3), "mismatch vs reference"

    print("KERNEL_OK")
</pallas_src>

<mosaic_0001>
module attributes {stable_mosaic.version = 11 : i64} {
  func.func @_conv_bn_kernel(%arg0: i32, %arg1: i32, %arg2: memref<1x18x24x16xf32, #tpu.memory_space<vmem>>, %arg3: memref<3x3x16x32xf32, #tpu.memory_space<vmem>>, %arg4: memref<1x32xf32, #tpu.memory_space<vmem>>, %arg5: memref<1x32xf32, #tpu.memory_space<vmem>>, %arg6: memref<1x8x16x32xf32, #tpu.memory_space<vmem>>) attributes {dimension_semantics = [#tpu.dimension_semantics<parallel>, #tpu.dimension_semantics<parallel>], iteration_bounds = array<i64: 2, 2>, scalar_prefetch = 0 : i64, scratch_operands = 0 : i64, tpu.core_type = #tpu.core_type<tc>, window_params = [{transform_indices = @transform_0, window_bounds = array<i64: 1, 18, 24, 16>}, {pipeline_mode = #tpu.pipeline_mode<synchronous>, transform_indices = @transform_1, window_bounds = array<i64: 3, 3, 16, 32>}, {pipeline_mode = #tpu.pipeline_mode<synchronous>, transform_indices = @transform_2, window_bounds = array<i64: 1, 32>}, {pipeline_mode = #tpu.pipeline_mode<synchronous>, transform_indices = @transform_3, window_bounds = array<i64: 1, 32>}, {transform_indices = @transform_4, window_bounds = array<i64: 1, 8, 16, 32>}]} {
    %c8_i32 = arith.constant 8 : i32
    %0 = arith.muli %arg1, %c8_i32 : i32
    %1 = tpu.assume_multiple %0, 8 : i32
    %cst = arith.constant 0.000000e+00 : f32
    %2 = vector.broadcast %cst : f32 to vector<128x32xf32>
    %c0_i32 = arith.constant 0 : i32
    %3 = arith.addi %1, %c0_i32 : i32
    %c0 = arith.constant 0 : index
    %4 = arith.index_cast %3 : i32 to index
    %c0_0 = arith.constant 0 : index
    %c0_1 = arith.constant 0 : index
    %5 = vector.load %arg2[%c0, %4, %c0_0, %c0_1] : memref<1x18x24x16xf32, #tpu.memory_space<vmem>>, vector<1x8x16x16xf32>
    %6 = vector.shape_cast %5 : vector<1x8x16x16xf32> to vector<8x16x16xf32>
    %7 = vector.shape_cast %6 : vector<8x16x16xf32> to vector<128x16xf32>
    %c0_2 = arith.constant 0 : index
    %c0_3 = arith.constant 0 : index
    %c0_4 = arith.constant 0 : index
    %c0_5 = arith.constant 0 : index
    %8 = vector.load %arg3[%c0_2, %c0_3, %c0_4, %c0_5] : memref<3x3x16x32xf32, #tpu.memory_space<vmem>>, vector<1x1x16x32xf32>
    %9 = vector.shape_cast %8 : vector<1x1x16x32xf32> to vector<16x32xf32>
    %cst_6 = arith.constant dense<0.000000e+00> : vector<128x32xf32>
    %10 = tpu.matmul %7, %9, %cst_6 {dimension_numbers = #tpu.dot_dimension_numbers<[1], [0], [0], [1], [0, 0, 1, 1], [], []>} : vector<128x16xf32>, vector<16x32xf32>, vector<128x32xf32> -> vector<128x32xf32>
    %11 = arith.addf %2, %10 : vector<128x32xf32>
    %c0_i32_7 = arith.constant 0 : i32
    %12 = arith.addi %1, %c0_i32_7 : i32
    %c0_8 = arith.constant 0 : index
    %13 = arith.index_cast %12 : i32 to index
    %c1 = arith.constant 1 : index
    %c0_9 = arith.constant 0 : index
    %14 = vector.load %arg2[%c0_8, %13, %c1, %c0_9] : memref<1x18x24x16xf32, #tpu.memory_space<vmem>>, vector<1x8x16x16xf32>
    %15 = vector.shape_cast %14 : vector<1x8x16x16xf32> to vector<8x16x16xf32>
    %16 = vector.shape_cast %15 : vector<8x16x16xf32> to vector<128x16xf32>
    %c0_10 = arith.constant 0 : index
    %c1_11 = arith.constant 1 : index
    %c0_12 = arith.constant 0 : index
    %c0_13 = arith.constant 0 : index
    %17 = vector.load %arg3[%c0_10, %c1_11, %c0_12, %c0_13] : memref<3x3x16x32xf32, #tpu.memory_space<vmem>>, vector<1x1x16x32xf32>
    %18 = vector.shape_cast %17 : vector<1x1x16x32xf32> to vector<16x32xf32>
    %cst_14 = arith.constant dense<0.000000e+00> : vector<128x32xf32>
    %19 = tpu.matmul %16, %18, %cst_14 {dimension_numbers = #tpu.dot_dimension_numbers<[1], [0], [0], [1], [0, 0, 1, 1], [], []>} : vector<128x16xf32>, vector<16x32xf32>, vector<128x32xf32> -> vector<128x32xf32>
    %20 = arith.addf %11, %19 : vector<128x32xf32>
    %c0_i32_15 = arith.constant 0 : i32
    %21 = arith.addi %1, %c0_i32_15 : i32
    %c0_16 = arith.constant 0 : index
    %22 = arith.index_cast %21 : i32 to index
    %c2 = arith.constant 2 : index
    %c0_17 = arith.constant 0 : index
    %23 = vector.load %arg2[%c0_16, %22, %c2, %c0_17] : memref<1x18x24x16xf32, #tpu.memory_space<vmem>>, vector<1x8x16x16xf32>
    %24 = vector.shape_cast %23 : vector<1x8x16x16xf32> to vector<8x16x16xf32>
    %25 = vector.shape_cast %24 : vector<8x16x16xf32> to vector<128x16xf32>
    %c0_18 = arith.constant 0 : index
    %c2_19 = arith.constant 2 : index
    %c0_20 = arith.constant 0 : index
    %c0_21 = arith.constant 0 : index
    %26 = vector.load %arg3[%c0_18, %c2_19, %c0_20, %c0_21] : memref<3x3x16x32xf32, #tpu.memory_space<vmem>>, vector<1x1x16x32xf32>
    %27 = vector.shape_cast %26 : vector<1x1x16x32xf32> to vector<16x32xf32>
    %cst_22 = arith.constant dense<0.000000e+00> : vector<128x32xf32>
    %28 = tpu.matmul %25, %27, %cst_22 {dimension_numbers = #tpu.dot_dimension_numbers<[1], [0], [0], [1], [0, 0, 1, 1], [], []>} : vector<128x16xf32>, vector<16x32xf32>, vector<128x32xf32> -> vector<128x32xf32>
    %29 = arith.addf %20, %28 : vector<128x32xf32>
    %c1_i32 = arith.constant 1 : i32
    %30 = arith.addi %1, %c1_i32 : i32
    %c0_23 = arith.constant 0 : index
    %31 = arith.index_cast %30 : i32 to index
    %c0_24 = arith.constant 0 : index
    %c0_25 = arith.constant 0 : index
    %32 = vector.load %arg2[%c0_23, %31, %c0_24, %c0_25] : memref<1x18x24x16xf32, #tpu.memory_space<vmem>>, vector<1x8x16x16xf32>
    %33 = vector.shape_cast %32 : vector<1x8x16x16xf32> to vector<8x16x16xf32>
    %34 = vector.shape_cast %33 : vector<8x16x16xf32> to vector<128x16xf32>
    %c1_26 = arith.constant 1 : index
    %c0_27 = arith.constant 0 : index
    %c0_28 = arith.constant 0 : index
    %c0_29 = arith.constant 0 : index
    %35 = vector.load %arg3[%c1_26, %c0_27, %c0_28, %c0_29] : memref<3x3x16x32xf32, #tpu.memory_space<vmem>>, vector<1x1x16x32xf32>
    %36 = vector.shape_cast %35 : vector<1x1x16x32xf32> to vector<16x32xf32>
    %cst_30 = arith.constant dense<0.000000e+00> : vector<128x32xf32>
    %37 = tpu.matmul %34, %36, %cst_30 {dimension_numbers = #tpu.dot_dimension_numbers<[1], [0], [0], [1], [0, 0, 1, 1], [], []>} : vector<128x16xf32>, vector<16x32xf32>, vector<128x32xf32> -> vector<128x32xf32>
    %38 = arith.addf %29, %37 : vector<128x32xf32>
    %c1_i32_31 = arith.constant 1 : i32
    %39 = arith.addi %1, %c1_i32_31 : i32
    %c0_32 = arith.constant 0 : index
    %40 = arith.index_cast %39 : i32 to index
    %c1_33 = arith.constant 1 : index
    %c0_34 = arith.constant 0 : index
    %41 = vector.load %arg2[%c0_32, %40, %c1_33, %c0_34] : memref<1x18x24x16xf32, #tpu.memory_space<vmem>>, vector<1x8x16x16xf32>
    %42 = vector.shape_cast %41 : vector<1x8x16x16xf32> to vector<8x16x16xf32>
    %43 = vector.shape_cast %42 : vector<8x16x16xf32> to vector<128x16xf32>
    %c1_35 = arith.constant 1 : index
    %c1_36 = arith.constant 1 : index
    %c0_37 = arith.constant 0 : index
    %c0_38 = arith.constant 0 : index
    %44 = vector.load %arg3[%c1_35, %c1_36, %c0_37, %c0_38] : memref<3x3x16x32xf32, #tpu.memory_space<vmem>>, vector<1x1x16x32xf32>
    %45 = vector.shape_cast %44 : vector<1x1x16x32xf32> to vector<16x32xf32>
    %cst_39 = arith.constant dense<0.000000e+00> : vector<128x32xf32>
    %46 = tpu.matmul %43, %45, %cst_39 {dimension_numbers = #tpu.dot_dimension_numbers<[1], [0], [0], [1], [0, 0, 1, 1], [], []>} : vector<128x16xf32>, vector<16x32xf32>, vector<128x32xf32> -> vector<128x32xf32>
    %47 = arith.addf %38, %46 : vector<128x32xf32>
    %c1_i32_40 = arith.constant 1 : i32
    %48 = arith.addi %1, %c1_i32_40 : i32
    %c0_41 = arith.constant 0 : index
    %49 = arith.index_cast %48 : i32 to index
    %c2_42 = arith.constant 2 : index
    %c0_43 = arith.constant 0 : index
    %50 = vector.load %arg2[%c0_41, %49, %c2_42, %c0_43] : memref<1x18x24x16xf32, #tpu.memory_space<vmem>>, vector<1x8x16x16xf32>
    %51 = vector.shape_cast %50 : vector<1x8x16x16xf32> to vector<8x16x16xf32>
    %52 = vector.shape_cast %51 : vector<8x16x16xf32> to vector<128x16xf32>
    %c1_44 = arith.constant 1 : index
    %c2_45 = arith.constant 2 : index
    %c0_46 = arith.constant 0 : index
    %c0_47 = arith.constant 0 : index
    %53 = vector.load %arg3[%c1_44, %c2_45, %c0_46, %c0_47] : memref<3x3x16x32xf32, #tpu.memory_space<vmem>>, vector<1x1x16x32xf32>
    %54 = vector.shape_cast %53 : vector<1x1x16x32xf32> to vector<16x32xf32>
    %cst_48 = arith.constant dense<0.000000e+00> : vector<128x32xf32>
    %55 = tpu.matmul %52, %54, %cst_48 {dimension_numbers = #tpu.dot_dimension_numbers<[1], [0], [0], [1], [0, 0, 1, 1], [], []>} : vector<128x16xf32>, vector<16x32xf32>, vector<128x32xf32> -> vector<128x32xf32>
    %56 = arith.addf %47, %55 : vector<128x32xf32>
    %c2_i32 = arith.constant 2 : i32
    %57 = arith.addi %1, %c2_i32 : i32
    %c0_49 = arith.constant 0 : index
    %58 = arith.index_cast %57 : i32 to index
    %c0_50 = arith.constant 0 : index
    %c0_51 = arith.constant 0 : index
    %59 = vector.load %arg2[%c0_49, %58, %c0_50, %c0_51] : memref<1x18x24x16xf32, #tpu.memory_space<vmem>>, vector<1x8x16x16xf32>
    %60 = vector.shape_cast %59 : vector<1x8x16x16xf32> to vector<8x16x16xf32>
    %61 = vector.shape_cast %60 : vector<8x16x16xf32> to vector<128x16xf32>
    %c2_52 = arith.constant 2 : index
    %c0_53 = arith.constant 0 : index
    %c0_54 = arith.constant 0 : index
    %c0_55 = arith.constant 0 : index
    %62 = vector.load %arg3[%c2_52, %c0_53, %c0_54, %c0_55] : memref<3x3x16x32xf32, #tpu.memory_space<vmem>>, vector<1x1x16x32xf32>
    %63 = vector.shape_cast %62 : vector<1x1x16x32xf32> to vector<16x32xf32>
    %cst_56 = arith.constant dense<0.000000e+00> : vector<128x32xf32>
    %64 = tpu.matmul %61, %63, %cst_56 {dimension_numbers = #tpu.dot_dimension_numbers<[1], [0], [0], [1], [0, 0, 1, 1], [], []>} : vector<128x16xf32>, vector<16x32xf32>, vector<128x32xf32> -> vector<128x32xf32>
    %65 = arith.addf %56, %64 : vector<128x32xf32>
    %c2_i32_57 = arith.constant 2 : i32
    %66 = arith.addi %1, %c2_i32_57 : i32
    %c0_58 = arith.constant 0 : index
    %67 = arith.index_cast %66 : i32 to index
    %c1_59 = arith.constant 1 : index
    %c0_60 = arith.constant 0 : index
    %68 = vector.load %arg2[%c0_58, %67, %c1_59, %c0_60] : memref<1x18x24x16xf32, #tpu.memory_space<vmem>>, vector<1x8x16x16xf32>
    %69 = vector.shape_cast %68 : vector<1x8x16x16xf32> to vector<8x16x16xf32>
    %70 = vector.shape_cast %69 : vector<8x16x16xf32> to vector<128x16xf32>
    %c2_61 = arith.constant 2 : index
    %c1_62 = arith.constant 1 : index
    %c0_63 = arith.constant 0 : index
    %c0_64 = arith.constant 0 : index
    %71 = vector.load %arg3[%c2_61, %c1_62, %c0_63, %c0_64] : memref<3x3x16x32xf32, #tpu.memory_space<vmem>>, vector<1x1x16x32xf32>
    %72 = vector.shape_cast %71 : vector<1x1x16x32xf32> to vector<16x32xf32>
    %cst_65 = arith.constant dense<0.000000e+00> : vector<128x32xf32>
    %73 = tpu.matmul %70, %72, %cst_65 {dimension_numbers = #tpu.dot_dimension_numbers<[1], [0], [0], [1], [0, 0, 1, 1], [], []>} : vector<128x16xf32>, vector<16x32xf32>, vector<128x32xf32> -> vector<128x32xf32>
    %74 = arith.addf %65, %73 : vector<128x32xf32>
    %c2_i32_66 = arith.constant 2 : i32
    %75 = arith.addi %1, %c2_i32_66 : i32
    %c0_67 = arith.constant 0 : index
    %76 = arith.index_cast %75 : i32 to index
    %c2_68 = arith.constant 2 : index
    %c0_69 = arith.constant 0 : index
    %77 = vector.load %arg2[%c0_67, %76, %c2_68, %c0_69] : memref<1x18x24x16xf32, #tpu.memory_space<vmem>>, vector<1x8x16x16xf32>
    %78 = vector.shape_cast %77 : vector<1x8x16x16xf32> to vector<8x16x16xf32>
    %79 = vector.shape_cast %78 : vector<8x16x16xf32> to vector<128x16xf32>
    %c2_70 = arith.constant 2 : index
    %c2_71 = arith.constant 2 : index
    %c0_72 = arith.constant 0 : index
    %c0_73 = arith.constant 0 : index
    %80 = vector.load %arg3[%c2_70, %c2_71, %c0_72, %c0_73] : memref<3x3x16x32xf32, #tpu.memory_space<vmem>>, vector<1x1x16x32xf32>
    %81 = vector.shape_cast %80 : vector<1x1x16x32xf32> to vector<16x32xf32>
    %cst_74 = arith.constant dense<0.000000e+00> : vector<128x32xf32>
    %82 = tpu.matmul %79, %81, %cst_74 {dimension_numbers = #tpu.dot_dimension_numbers<[1], [0], [0], [1], [0, 0, 1, 1], [], []>} : vector<128x16xf32>, vector<16x32xf32>, vector<128x32xf32> -> vector<128x32xf32>
    %83 = arith.addf %74, %82 : vector<128x32xf32>
    %c0_75 = arith.constant 0 : index
    %c0_76 = arith.constant 0 : index
    %84 = vector.load %arg4[%c0_75, %c0_76] : memref<1x32xf32, #tpu.memory_space<vmem>>, vector<1x32xf32>
    %85 = vector.broadcast %84 : vector<1x32xf32> to vector<128x32xf32>
    %86 = arith.mulf %83, %85 : vector<128x32xf32>
    %c0_77 = arith.constant 0 : index
    %c0_78 = arith.constant 0 : index
    %87 = vector.load %arg5[%c0_77, %c0_78] : memref<1x32xf32, #tpu.memory_space<vmem>>, vector<1x32xf32>
    %88 = vector.broadcast %87 : vector<1x32xf32> to vector<128x32xf32>
    %89 = arith.addf %86, %88 : vector<128x32xf32>
    %90 = vector.shape_cast %89 : vector<128x32xf32> to vector<8x16x32xf32>
    %c0_79 = arith.constant 0 : index
    %c0_80 = arith.constant 0 : index
    %c0_81 = arith.constant 0 : index
    %c0_82 = arith.constant 0 : index
    %91 = vector.load %arg6[%c0_79, %c0_80, %c0_81, %c0_82] : memref<1x8x16x32xf32, #tpu.memory_space<vmem>>, vector<1x8x16x32xf32>
    %92 = vector.shape_cast %91 : vector<1x8x16x32xf32> to vector<8x16x32xf32>
    %93 = vector.shape_cast %90 : vector<8x16x32xf32> to vector<1x8x16x32xf32>
    tpu.vector_store %arg6[%c0_79, %c0_80, %c0_81, %c0_82], %93 {strides = array<i32>} : memref<1x8x16x32xf32, #tpu.memory_space<vmem>>, vector<1x8x16x32xf32>,
    return
  }
  func.func @transform_0(%arg0: i32, %arg1: i32) -> (i32, i32, i32, i32) {
    %c0_i32 = arith.constant 0 : i32
    %c0_i32_0 = arith.constant 0 : i32
    %c0_i32_1 = arith.constant 0 : i32
    %c0_i32_2 = arith.constant 0 : i32
    return %arg0, %c0_i32, %c0_i32_0, %c0_i32_1 : i32, i32, i32, i32
  }
  func.func @transform_1(%arg0: i32, %arg1: i32) -> (i32, i32, i32, i32) {
    %c0_i32 = arith.constant 0 : i32
    %c0_i32_0 = arith.constant 0 : i32
    %c0_i32_1 = arith.constant 0 : i32
    %c0_i32_2 = arith.constant 0 : i32
    %c0_i32_3 = arith.constant 0 : i32
    return %c0_i32, %c0_i32_0, %c0_i32_1, %c0_i32_2 : i32, i32, i32, i32
  }
  func.func @transform_2(%arg0: i32, %arg1: i32) -> (i32, i32) {
    %c0_i32 = arith.constant 0 : i32
    %c0_i32_0 = arith.constant 0 : i32
    %c0_i32_1 = arith.constant 0 : i32
    return %c0_i32, %c0_i32_0 : i32, i32
  }
  func.func @transform_3(%arg0: i32, %arg1: i32) -> (i32, i32) {
    %c0_i32 = arith.constant 0 : i32
    %c0_i32_0 = arith.constant 0 : i32
    %c0_i32_1 = arith.constant 0 : i32
    return %c0_i32, %c0_i32_0 : i32, i32
  }
  func.func @transform_4(%arg0: i32, %arg1: i32) -> (i32, i32, i32, i32) {
    %c0_i32 = arith.constant 0 : i32
    %c0_i32_0 = arith.constant 0 : i32
    %c0_i32_1 = arith.constant 0 : i32
    return %arg0, %arg1, %c0_i32, %c0_i32_0 : i32, i32, i32, i32
  }
}

</mosaic_0001>

<llo_original>
// kernel: tpu_custom_call.1
$region0: #{tpu_custom_call.1}
  #allocation0 [shape = 'u32[]', space=smem, size = 0x4, offset = 0x4, fixed_abs, tag = 'smem constant byte address 0x4 - core index']
  #allocation1 [shape = 'u32[144,128]{1,0:T(1,128)}', space=vmem, size = 0x12000, scoped, tag = 'internal scratch']
  %s0 = inlined_call_operand.vmem [shape: f32[2,18,24,16], index: 0, kind: input, shape index: {}]
  %s1 = inlined_call_operand.vmem [shape: f32[3,3,16,32], index: 1, kind: input, shape index: {}]
  %s2 = inlined_call_operand.vmem [shape: f32[1,32], index: 2, kind: input, shape index: {}]
  %s3 = inlined_call_operand.vmem [shape: f32[1,32], index: 3, kind: input, shape index: {}]
  %s4 = inlined_call_operand.hbm [shape: f32[2,16,16,32], index: 4, kind: output, shape index: {}]
  %s5 = sld [smem:[#allocation0]]
  $region49: #{tpu_custom_call.1} parent=0
    _
  %s7 = ssub.s32 1, %s5
  %s8 = scalar_select 0, %s7, %s5
  $region1: #{tpu_custom_call.1} parent=0
    #allocation2 [shape = 'u8[131072]{0}', space=vmem, size = 0x20000, scoped, tag = 'output window, operand 0']
    #allocation3 [shape = 's32[2]{0}', space=sflag, size = 0x8, scoped, tag = 'scoped memory for tpu_custom_call.1']
    %9 = vsyncpa [#allocation3], 0
    %s10 = scalar_lea.sflag [#allocation3], 1
    %11 = vsyncpa %s10, 0
    loop: start=0, step=1, limit=6
    $region2: #{tpu_custom_call.1} parent=1 // loop_pre_header
      _
    $region3: #{tpu_custom_call.1} parent=1 // loop_header
      %s13 = sphi 0, %s17
      %p14 = scmp.ge.s32.totalorder %s13, 6
      %s20 = sphi 0, %s32
      %s21 = sphi 0, %s28
      %s22 = sphi 0, %s20
      %s23 = sphi 0, %s21
      %s24 = sphi 0, %s22
      %s25 = sphi 0, %s23
      %s35 = sphi 0, %s37
      %s38 = sphi 0, %s35
      %s39 = sphi 0, %s38
      %s55 = sphi 0, %s39
      %s59 = sphi 0, %s59
      %s61 = sphi 0, %s59
      %s62 = sphi 0, %s61
      %s76 = sphi 0, %s62
      %s80 = sphi 0, %s80
      %s82 = sphi 0, %s80
      %s83 = sphi 0, %s82
      %s97 = sphi 0, %s83
      %s101 = sphi 0, %s101
      %s103 = sphi 0, %s101
      %s104 = sphi 0, %s103
      %s118 = sphi 0, %s104
      %s126 = sphi 0, %s128
      %s129 = sphi 0, %s126
      %s130 = sphi 0, %s129
      %s146 = sphi 0, %s130
    $region4: #{tpu_custom_call.1} parent=1 // loop_header_branch
      %16 = sbr.rel (%p14) target = $region8
    $region5: #{tpu_custom_call.1} parent=1 // loop_body
      %s18 = ssub.s32 %s13, 1
      %s19 = ssub.s32 %s13, 2
      %s26 = sadd.s32 1, %s21
      %p27 = scmp.ge.s32.totalorder %s26, 2
      %s28 = scalar_select %p27, 0, %s26
      %s29 = sadd.s32 1, %s20
      %s30 = scalar_select %p27, %s29, %s20
      %p31 = scmp.ge.s32.totalorder %s30, 2
      %s32 = scalar_select %p31, 0, %s30
      %s33 = ssub.s32 %s20, %s32
      %p34 = scmp.eq.s32.totalorder %s33, 0
      %s36 = sadd.s32 %s35, 1
      %s37 = scalar_select %p34, %s35, %s36
      %p40 = pneg %p34
      %p41 = scmp.eq.s32.totalorder %s13, 3
      %p42 = por %p40, %p41
      %p43 = scmp.ne.s32.totalorder %s35, %s38
      %p44 = scmp.eq.s32.totalorder %s13, 0
      %p45 = por %p43, %p44
      %p46 = scmp.ne.s32.totalorder %s35, %s38
      %p47 = scmp.eq.s32.totalorder %s18, 3
      %p48 = por %p46, %p47
      %p49 = scmp.ne.s32.totalorder %s38, %s39
      %p50 = scmp.eq.s32.totalorder %s18, 0
      %p51 = por %p49, %p50
      %p52 = scmp.ne.s32.totalorder %s38, %s39
      %p53 = scmp.eq.s32.totalorder %s19, 3
      %p54 = por %p52, %p53
      %p56 = scmp.ne.s32.totalorder %s39, %s55
      %p57 = scmp.eq.s32.totalorder %s19, 0
      %p58 = por %p56, %p57
      %s60 = sadd.s32 %s59, 1
      %p63 = scmp.eq.s32.totalorder %s13, 3
      %p64 = scmp.ne.s32.totalorder %s59, %s61
      %p65 = scmp.eq.s32.totalorder %s13, 0
      %p66 = por %p64, %p65
      %p67 = scmp.ne.s32.totalorder %s59, %s61
      %p68 = scmp.eq.s32.totalorder %s18, 3
      %p69 = por %p67, %p68
      %p70 = scmp.ne.s32.totalorder %s61, %s62
      %p71 = scmp.eq.s32.totalorder %s18, 0
      %p72 = por %p70, %p71
      %p73 = scmp.ne.s32.totalorder %s61, %s62
      %p74 = scmp.eq.s32.totalorder %s19, 3
      %p75 = por %p73, %p74
      %p77 = scmp.ne.s32.totalorder %s62, %s76
      %p78 = scmp.eq.s32.totalorder %s19, 0
      %p79 = por %p77, %p78
      %s81 = sadd.s32 %s80, 1
      %p84 = scmp.eq.s32.totalorder %s13, 3
      %p85 = scmp.ne.s32.totalorder %s80, %s82
      %p86 = scmp.eq.s32.totalorder %s13, 0
      %p87 = por %p85, %p86
      %p88 = scmp.ne.s32.totalorder %s80, %s82
      %p89 = scmp.eq.s32.totalorder %s18, 3
      %p90 = por %p88, %p89
      %p91 = scmp.ne.s32.totalorder %s82, %s83
      %p92 = scmp.eq.s32.totalorder %s18, 0
      %p93 = por %p91, %p92
      %p94 = scmp.ne.s32.totalorder %s82, %s83
      %p95 = scmp.eq.s32.totalorder %s19, 3
      %p96 = por %p94, %p95
      %p98 = scmp.ne.s32.totalorder %s83, %s97
      %p99 = scmp.eq.s32.totalorder %s19, 0
      %p100 = por %p98, %p99
      %s102 = sadd.s32 %s101, 1
      %p105 = scmp.eq.s32.totalorder %s13, 3
      %p106 = scmp.ne.s32.totalorder %s101, %s103
      %p107 = scmp.eq.s32.totalorder %s13, 0
      %p108 = por %p106, %p107
      %p109 = scmp.ne.s32.totalorder %s101, %s103
      %p110 = scmp.eq.s32.totalorder %s18, 3
      %p111 = por %p109, %p110
      %p112 = scmp.ne.s32.totalorder %s103, %s104
      %p113 = scmp.eq.s32.totalorder %s18, 0
      %p114 = por %p112, %p113
      %p115 = scmp.ne.s32.totalorder %s103, %s104
      %p116 = scmp.eq.s32.totalorder %s19, 3
      %p117 = por %p115, %p116
      %p119 = scmp.ne.s32.totalorder %s104, %s118
      %p120 = scmp.eq.s32.totalorder %s19, 0
      %p121 = por %p119, %p120
      %s122 = ssub.s32 %s20, %s32
      %s123 = ssub.s32 %s21, %s28
      %s124 = sor.u32 %s122, %s123
      %p125 = scmp.eq.s32.totalorder %s124, 0
      %s127 = sadd.s32 %s126, 1
      %s128 = scalar_select %p125, %s126, %s127
      %p131 = pneg %p125
      %p132 = scmp.eq.s32.totalorder %s13, 3
      %p133 = por %p131, %p132
      %p134 = scmp.ne.s32.totalorder %s126, %s129
      %p135 = scmp.eq.s32.totalorder %s13, 0
      %p136 = por %p134, %p135
      %p137 = scmp.ne.s32.totalorder %s126, %s129
      %p138 = scmp.eq.s32.totalorder %s18, 3
      %p139 = por %p137, %p138
      %p140 = scmp.ne.s32.totalorder %s129, %s130
      %p141 = scmp.eq.s32.totalorder %s18, 0
      %p142 = por %p140, %p141
      %p143 = scmp.ne.s32.totalorder %s129, %s130
      %p144 = scmp.eq.s32.totalorder %s19, 3
      %p145 = por %p143, %p144
      %p147 = scmp.ne.s32.totalorder %s130, %s146
      %p148 = scmp.eq.s32.totalorder %s19, 0
      %p149 = por %p147, %p148
      %p150 = scmp.le.s32.totalorder 1, %s13
      %p151 = scmp.lt.s32.totalorder %s13, 5
      %p152 = pnand %p150, %p151
      %p153 = pneg %p152
      // Predicated region
      $region9: #{tpu_custom_call.1} parent=5 // pred_check
        _
      $region10: #{tpu_custom_call.1} parent=5 // pred_check_branch
        %155 = sbr.rel (%p152) target = $region12
      $region11: #{tpu_custom_call.1} parent=5 // pred_region
        %s156 = ssub.s32 %s13, 1
        // Predicated region
        $region13: #{tpu_custom_call.1} parent=11 // pred_check
          %p157 = pneg %p72
        $region14: #{tpu_custom_call.1} parent=11 // pred_check_branch
          %159 = sbr.rel (%p157) target = $region16
        $region15: #{tpu_custom_call.1} parent=11 // pred_region
          _
        $region16: #{tpu_custom_call.1} parent=11 // pred_fallthru
          _
        // Predicated region
        $region17: #{tpu_custom_call.1} parent=11 // pred_check
          %p160 = pneg %p93
        $region18: #{tpu_custom_call.1} parent=11 // pred_check_branch
          %162 = sbr.rel (%p160) target = $region20
        $region19: #{tpu_custom_call.1} parent=11 // pred_region
          _
        $region20: #{tpu_custom_call.1} parent=11 // pred_fallthru
          _
        // Predicated region
        $region21: #{tpu_custom_call.1} parent=11 // pred_check
          %p163 = pneg %p114
        $region22: #{tpu_custom_call.1} parent=11 // pred_check_branch
          %165 = sbr.rel (%p163) target = $region24
        $region23: #{tpu_custom_call.1} parent=11 // pred_region
          _
        $region24: #{tpu_custom_call.1} parent=11 // pred_fallthru
          _
      $region12: #{tpu_custom_call.1} parent=5 // pred_fallthru
        _
      %p166 = scmp.lt.s32.totalorder %s13, 4
      // Predicated region
      $region25: #{tpu_custom_call.1} parent=5 // pred_check
        %p167 = pneg %p166
      $region26: #{tpu_custom_call.1} parent=5 // pred_check_branch
        %169 = sbr.rel (%p167) target = $region28
      $region27: #{tpu_custom_call.1} parent=5 // pred_region
        // Predicated region
        $region29: #{tpu_custom_call.1} parent=27 // pred_check
          %p170 = pneg %p45
        $region30: #{tpu_custom_call.1} parent=27 // pred_check_branch
          %172 = sbr.rel (%p170) target = $region32
        $region31: #{tpu_custom_call.1} parent=27 // pred_region
          %p173 = scmp.lt.s32.totalorder %s20, 1
          %s174 = scalar_select %p173, %s20, 1
          %s175 = smul.addr %s174, 54
          %s176 = smul.addr %s175, 8
          %s177 = scalar_lea.vmem %s0, %s176
        $region32: #{tpu_custom_call.1} parent=27 // pred_fallthru
          _
      $region28: #{tpu_custom_call.1} parent=5 // pred_fallthru
        _
      %p178 = scmp.le.s32.totalorder 1, %s13
      %p179 = scmp.lt.s32.totalorder %s13, 5
      %p180 = pnand %p178, %p179
      %p181 = pneg %p180
      // Predicated region
      $region33: #{tpu_custom_call.1} parent=5 // pred_check
        _
      $region34: #{tpu_custom_call.1} parent=5 // pred_check_branch
        %183 = sbr.rel (%p180) target = $region36
      $region35: #{tpu_custom_call.1} parent=5 // pred_region
        %s184 = ssub.s32 %s13, 1
        %p185 = scmp.lt.s32.totalorder %s22, 1
        %s186 = scalar_select %p185, %s22, 1
        %s187 = smul.addr %s186, 54
        %s188 = smul.addr %s187, 8
        %s189 = scalar_lea.vmem %s0, %s188
        %p190 = pneg %p51
        %p191 = pneg %p48
        %p192 = pneg %p72
        %p193 = pneg %p69
        %p194 = pneg %p93
        %p195 = pneg %p90
        %p196 = pneg %p114
        %p197 = pneg %p111
        %p198 = pneg %p142
        %p199 = pneg %p139
        %s200 = sand.u32 %s129, 1
        %s201 = scalar_lea.sflag [#allocation3], %s200
        %s202 = sand.u32 %s129, 1
        %s203 = smul.addr %s202, 128
        %s204 = scalar_lea.vmem [#allocation2], %s203
        %p205 = scmp.lt.s32.totalorder %s22, 1
        %s206 = scalar_select %p205, %s22, 1
        %s207 = smul.addr %s206, 54
        %s208 = smul.addr %s207, 8
        %s209 = scalar_lea.vmem %s0, %s208
        %s210 = smul.u32 8, %s23
        %s211 = smul.u32 %s23, 8
        %s212 = smul.u32 %s211, 24
        %s213 = scalar_lea.vmem %s209, %s212
        %v214 = vld [vmem:[%s213] sm:$0xff]
        %v215 = vld [vmem:[%s213 + $0x8] sm:$0xff]
        %v216 = vld [vmem:[%s213 + $0x18] sm:$0xff]
        %v217 = vld [vmem:[%s213 + $0x20] sm:$0xff]
        %v218 = vld [vmem:[%s213 + $0x30] sm:$0xff]
        %v219 = vld [vmem:[%s213 + $0x38] sm:$0xff]
        %v220 = vld [vmem:[%s213 + $0x48] sm:$0xff]
        %v221 = vld [vmem:[%s213 + $0x50] sm:$0xff]
        %v222 = vld [vmem:[%s213 + $0x60] sm:$0xff]
        %v223 = vld [vmem:[%s213 + $0x68] sm:$0xff]
        %v224 = vld [vmem:[%s213 + $0x78] sm:$0xff]
        %v225 = vld [vmem:[%s213 + $0x80] sm:$0xff]
        %v226 = vld [vmem:[%s213 + $0x90] sm:$0xff]
        %v227 = vld [vmem:[%s213 + $0x98] sm:$0xff]
        %v228 = vld [vmem:[%s213 + $0xa8] sm:$0xff]
        %v229 = vld [vmem:[%s213 + $0xb0] sm:$0xff]
        %v230 = vld [vmem:[%s1] sm:$0xff]
        %v231 = vld [vmem:[%s1 + $0x8] sm:$0xff]
        %v232 = vld [vmem:[%s213 + $0x1] sm:$0xff]
        %v233 = vld [vmem:[%s213 + $0x9] sm:$0xff]
        %v234 = vld [vmem:[%s213 + $0x19] sm:$0xff]
        %v235 = vld [vmem:[%s213 + $0x21] sm:$0xff]
        %v236 = vld [vmem:[%s213 + $0x31] sm:$0xff]
        %v237 = vld [vmem:[%s213 + $0x39] sm:$0xff]
        %v238 = vld [vmem:[%s213 + $0x49] sm:$0xff]
        %v239 = vld [vmem:[%s213 + $0x51] sm:$0xff]
        %v240 = vld [vmem:[%s213 + $0x61] sm:$0xff]
        %v241 = vld [vmem:[%s213 + $0x69] sm:$0xff]
        %v242 = vld [vmem:[%s213 + $0x79] sm:$0xff]
        %v243 = vld [vmem:[%s213 + $0x81] sm:$0xff]
        %v244 = vld [vmem:[%s213 + $0x91] sm:$0xff]
        %v245 = vld [vmem:[%s213 + $0x99] sm:$0xff]
        %v246 = vld [vmem:[%s213 + $0xa9] sm:$0xff]
        %v247 = vld [vmem:[%s213 + $0xb1] sm:$0xff]
        %s248 = scalar_lea.vmem %s1, 16
        %v249 = vld [vmem:[%s248] sm:$0xff]
        %v250 = vld [vmem:[%s248 + $0x8] sm:$0xff]
        %vm251 = vcmask 130048
        %v253 = vsel %vm251, %v232, 0
        %v256 = vsel %vm251, %v233, 0
        %v259 = vsel %vm251, %v234, 0
        %v262 = vsel %vm251, %v235, 0
        %v265 = vsel %vm251, %v236, 0
        %v268 = vsel %vm251, %v237, 0
        %v271 = vsel %vm251, %v238, 0
        %v274 = vsel %vm251, %v239, 0
        %v277 = vsel %vm251, %v240, 0
        %v280 = vsel %vm251, %v241, 0
        %v283 = vsel %vm251, %v242, 0
        %v286 = vsel %vm251, %v243, 0
        %v289 = vsel %vm251, %v244, 0
        %v292 = vsel %vm251, %v245, 0
        %v295 = vsel %vm251, %v246, 0
        %v298 = vsel %vm251, %v247, 0
        %300 = vmatprep.subr.mxu0 0.0
        %301 = vmatpush1.msra.mxu0 0.0
        %302 = vmatprep.subr.mxu0 0.0
        %303 = vmatpush1.msra.mxu0 0.0
        %304 = vmatprep.subr.mxu0 0.0
        %305 = vmatpush1.msra.mxu0 0.0
        %306 = vmatprep.subr.mxu0 0.0
        %307 = vmatpush1.msra.mxu0 0.0
        %308 = vmatprep.subr.mxu0 0.0
        %309 = vmatpush1.msra.mxu0 0.0
        %310 = vmatprep.subr.mxu0 0.0
        %311 = vmatpush1.msra.mxu0 0.0
        %312 = vmatprep.subr.mxu0 0.0
        %313 = vmatpush1.msra.mxu0 0.0
        %314 = vmatprep.subr.mxu0 0.0
        %315 = vmatpush1.msra.mxu0 0.0
        %316 = vmatprep.subr.mxu0 0.0
        %317 = vmatpush1.msra.mxu0 0.0
        %318 = vmatprep.subr.mxu0 0.0
        %319 = vmatpush1.msra.mxu0 0.0
        %320 = vmatprep.subr.mxu0 0.0
        %321 = vmatpush1.msra.mxu0 0.0
        %322 = vmatprep.subr.mxu0 0.0
        %323 = vmatpush1.msra.mxu0 0.0
        %324 = vmatprep.subr.mxu0 0.0
        %325 = vmatpush1.msra.mxu0 0.0
        %326 = vmatprep.subr.mxu0 0.0
        %327 = vmatpush1.msra.mxu0 0.0
        %328 = vmatprep.subr.mxu0 0.0
        %329 = vmatpush1.msra.mxu0 %v250
        %330 = vmatprep.subr.mxu0 0.0
        %331 = vmatpush1.msra.mxu0 %v249
        %332 = vmatprep.subr.mxu0 0.0
        %333 = vmatpush2.msra.mxu0 0.0
        %334 = vmatprep.subr.mxu0 0.0
        %335 = vmatpush2.msra.mxu0 0.0
        %336 = vmatprep.subr.mxu0 0.0
        %337 = vmatpush2.msra.mxu0 0.0
        %338 = vmatprep.subr.mxu0 0.0
        %339 = vmatpush2.msra.mxu0 0.0
        %340 = vmatprep.subr.mxu0 0.0
        %341 = vmatpush2.msra.mxu0 0.0
        %342 = vmatprep.subr.mxu0 0.0
        %343 = vmatpush2.msra.mxu0 0.0
        %344 = vmatprep.subr.mxu0 0.0
        %345 = vmatpush2.msra.mxu0 0.0
        %346 = vmatprep.subr.mxu0 0.0
        %347 = vmatpush2.msra.mxu0 0.0
        %348 = vmatprep.subr.mxu0 0.0
        %349 = vmatpush2.msra.mxu0 0.0
        %350 = vmatprep.subr.mxu0 0.0
        %351 = vmatpush2.msra.mxu0 0.0
        %352 = vmatprep.subr.mxu0 0.0
        %353 = vmatpush2.msra.mxu0 0.0
        %354 = vmatprep.subr.mxu0 0.0
        %355 = vmatpush2.msra.mxu0 0.0
        %356 = vmatprep.subr.mxu0 0.0
        %357 = vmatpush2.msra.mxu0 0.0
        %358 = vmatprep.subr.mxu0 0.0
        %359 = vmatpush2.msra.mxu0 0.0
        %360 = vmatprep.subr.mxu0 0.0
        %361 = vmatpush2.msra.mxu0 0.0
        %362 = vmatprep.subr.mxu0 0.0
        %363 = vmatpush2.msra.mxu0 0.0
        %364 = vmatprep.mubr.f32.mxu0 0.0
        %365 = vmatmul.mubr.f32.gmra.mxu0 %v253
        %v366 = vpop.f32.mrf.mxu0
        %v367 = vadd.f32 0.0, %v366
        %v368 = vpop.f32.mrf.mxu0
        %369 = vmatprep.mubr.f32.mxu0 0.0
        %370 = vmatmul.mubr.f32.gmra.mxu0 %v256
        %v371 = vpop.f32.mrf.mxu0
        %v372 = vadd.f32 0.0, %v371
        %v373 = vpop.f32.mrf.mxu0
        %374 = vmatprep.mubr.f32.mxu0 0.0
        %375 = vmatmul.mubr.f32.gmra.mxu0 %v259
        %v376 = vpop.f32.mrf.mxu0
        %v377 = vadd.f32 0.0, %v376
        %v378 = vpop.f32.mrf.mxu0
        %379 = vmatprep.mubr.f32.mxu0 0.0
        %380 = vmatmul.mubr.f32.gmra.mxu0 %v262
        %v381 = vpop.f32.mrf.mxu0
        %v382 = vadd.f32 0.0, %v381
        %v383 = vpop.f32.mrf.mxu0
        %384 = vmatprep.mubr.f32.mxu0 0.0
        %385 = vmatmul.mubr.f32.gmra.mxu0 %v265
        %v386 = vpop.f32.mrf.mxu0
        %v387 = vadd.f32 0.0, %v386
        %v388 = vpop.f32.mrf.mxu0
        %389 = vmatprep.mubr.f32.mxu0 0.0
        %390 = vmatmul.mubr.f32.gmra.mxu0 %v268
        %v391 = vpop.f32.mrf.mxu0
        %v392 = vadd.f32 0.0, %v391
        %v393 = vpop.f32.mrf.mxu0
        %394 = vmatprep.mubr.f32.mxu0 0.0
        %395 = vmatmul.mubr.f32.gmra.mxu0 %v271
        %v396 = vpop.f32.mrf.mxu0
        %v397 = vadd.f32 0.0, %v396
        %v398 = vpop.f32.mrf.mxu0
        %399 = vmatprep.mubr.f32.mxu0 0.0
        %400 = vmatmul.mubr.f32.gmra.mxu0 %v274
        %v401 = vpop.f32.mrf.mxu0
        %v402 = vadd.f32 0.0, %v401
        %v403 = vpop.f32.mrf.mxu0
        %404 = vmatprep.mubr.f32.mxu0 0.0
        %405 = vmatmul.mubr.f32.gmra.mxu0 %v277
        %v406 = vpop.f32.mrf.mxu0
        %v407 = vadd.f32 0.0, %v406
        %v408 = vpop.f32.mrf.mxu0
        %409 = vmatprep.mubr.f32.mxu0 0.0
        %410 = vmatmul.mubr.f32.gmra.mxu0 %v280
        %v411 = vpop.f32.mrf.mxu0
        %v412 = vadd.f32 0.0, %v411
        %v413 = vpop.f32.mrf.mxu0
        %414 = vmatprep.mubr.f32.mxu0 0.0
        %415 = vmatmul.mubr.f32.gmra.mxu0 %v283
        %v416 = vpop.f32.mrf.mxu0
        %v417 = vadd.f32 0.0, %v416
        %v418 = vpop.f32.mrf.mxu0
        %419 = vmatprep.mubr.f32.mxu0 0.0
        %420 = vmatmul.mubr.f32.gmra.mxu0 %v286
        %v421 = vpop.f32.mrf.mxu0
        %v422 = vadd.f32 0.0, %v421
        %v423 = vpop.f32.mrf.mxu0
        %424 = vmatprep.mubr.f32.mxu0 0.0
        %425 = vmatmul.mubr.f32.gmra.mxu0 %v289
        %v426 = vpop.f32.mrf.mxu0
        %v427 = vadd.f32 0.0, %v426
        %v428 = vpop.f32.mrf.mxu0
        %429 = vmatprep.mubr.f32.mxu0 0.0
        %430 = vmatmul.mubr.f32.gmra.mxu0 %v292
        %v431 = vpop.f32.mrf.mxu0
        %v432 = vadd.f32 0.0, %v431
        %v433 = vpop.f32.mrf.mxu0
        %434 = vmatprep.mubr.f32.mxu0 0.0
        %435 = vmatmul.mubr.f32.gmra.mxu0 %v295
        %v436 = vpop.f32.mrf.mxu0
        %v437 = vadd.f32 0.0, %v436
        %v438 = vpop.f32.mrf.mxu0
        %439 = vmatprep.mubr.f32.mxu0 0.0
        %440 = vmatmul.mubr.f32.gmra.mxu0 %v298
        %v441 = vpop.f32.mrf.mxu0
        %v442 = vadd.f32 0.0, %v441
        %v443 = vpop.f32.mrf.mxu0
        %444 = vdwg.mxu0
        %v446 = vsel %vm251, %v214, 0
        %v449 = vsel %vm251, %v215, 0
        %v452 = vsel %vm251, %v216, 0
        %v455 = vsel %vm251, %v217, 0
        %v458 = vsel %vm251, %v218, 0
        %v461 = vsel %vm251, %v219, 0
        %v464 = vsel %vm251, %v220, 0
        %v467 = vsel %vm251, %v221, 0
        %v470 = vsel %vm251, %v222, 0
        %v473 = vsel %vm251, %v223, 0
        %v476 = vsel %vm251, %v224, 0
        %v479 = vsel %vm251, %v225, 0
        %v482 = vsel %vm251, %v226, 0
        %v485 = vsel %vm251, %v227, 0
        %v488 = vsel %vm251, %v228, 0
        %v491 = vsel %vm251, %v229, 0
        %493 = vmatprep.subr.mxu0 0.0
        %494 = vmatpush1.msra.mxu0 0.0
        %495 = vmatprep.subr.mxu0 0.0
        %496 = vmatpush1.msra.mxu0 0.0
        %497 = vmatprep.subr.mxu0 0.0
        %498 = vmatpush1.msra.mxu0 0.0
        %499 = vmatprep.subr.mxu0 0.0
        %500 = vmatpush1.msra.mxu0 0.0
        %501 = vmatprep.subr.mxu0 0.0
        %502 = vmatpush1.msra.mxu0 0.0
        %503 = vmatprep.subr.mxu0 0.0
        %504 = vmatpush1.msra.mxu0 0.0
        %505 = vmatprep.subr.mxu0 0.0
        %506 = vmatpush1.msra.mxu0 0.0
        %507 = vmatprep.subr.mxu0 0.0
        %508 = vmatpush1.msra.mxu0 0.0
        %509 = vmatprep.subr.mxu0 0.0
        %510 = vmatpush1.msra.mxu0 0.0
        %511 = vmatprep.subr.mxu0 0.0
        %512 = vmatpush1.msra.mxu0 0.0
        %513 = vmatprep.subr.mxu0 0.0
        %514 = vmatpush1.msra.mxu0 0.0
        %515 = vmatprep.subr.mxu0 0.0
        %516 = vmatpush1.msra.mxu0 0.0
        %517 = vmatprep.subr.mxu0 0.0
        %518 = vmatpush1.msra.mxu0 0.0
        %519 = vmatprep.subr.mxu0 0.0
        %520 = vmatpush1.msra.mxu0 0.0
        %521 = vmatprep.subr.mxu0 0.0
        %522 = vmatpush1.msra.mxu0 %v231
        %523 = vmatprep.subr.mxu0 0.0
        %524 = vmatpush1.msra.mxu0 %v230
        %525 = vmatprep.subr.mxu0 0.0
        %526 = vmatpush2.msra.mxu0 0.0
        %527 = vmatprep.subr.mxu0 0.0
        %528 = vmatpush2.msra.mxu0 0.0
        %529 = vmatprep.subr.mxu0 0.0
        %530 = vmatpush2.msra.mxu0 0.0
        %531 = vmatprep.subr.mxu0 0.0
        %532 = vmatpush2.msra.mxu0 0.0
        %533 = vmatprep.subr.mxu0 0.0
        %534 = vmatpush2.msra.mxu0 0.0
        %535 = vmatprep.subr.mxu0 0.0
        %536 = vmatpush2.msra.mxu0 0.0
        %537 = vmatprep.subr.mxu0 0.0
        %538 = vmatpush2.msra.mxu0 0.0
        %539 = vmatprep.subr.mxu0 0.0
        %540 = vmatpush2.msra.mxu0 0.0
        %541 = vmatprep.subr.mxu0 0.0
        %542 = vmatpush2.msra.mxu0 0.0
        %543 = vmatprep.subr.mxu0 0.0
        %544 = vmatpush2.msra.mxu0 0.0
        %545 = vmatprep.subr.mxu0 0.0
        %546 = vmatpush2.msra.mxu0 0.0
        %547 = vmatprep.subr.mxu0 0.0
        %548 = vmatpush2.msra.mxu0 0.0
        %549 = vmatprep.subr.mxu0 0.0
        %550 = vmatpush2.msra.mxu0 0.0
        %551 = vmatprep.subr.mxu0 0.0
        %552 = vmatpush2.msra.mxu0 0.0
        %553 = vmatprep.subr.mxu0 0.0
        %554 = vmatpush2.msra.mxu0 0.0
        %555 = vmatprep.subr.mxu0 0.0
        %556 = vmatpush2.msra.mxu0 0.0
        %557 = vmatprep.mubr.f32.mxu0 0.0
        %558 = vmatmul.mubr.f32.gmra.mxu0 %v446
        %v559 = vpop.f32.mrf.mxu0
        %v560 = vadd.f32 %v367, %v559
        %v561 = vpop.f32.mrf.mxu0
        %562 = vmatprep.mubr.f32.mxu0 0.0
        %563 = vmatmul.mubr.f32.gmra.mxu0 %v449
        %v564 = vpop.f32.mrf.mxu0
        %v565 = vadd.f32 %v372, %v564
        %v566 = vpop.f32.mrf.mxu0
        %567 = vmatprep.mubr.f32.mxu0 0.0
        %568 = vmatmul.mubr.f32.gmra.mxu0 %v452
        %v569 = vpop.f32.mrf.mxu0
        %v570 = vadd.f32 %v377, %v569
        %v571 = vpop.f32.mrf.mxu0
        %572 = vmatprep.mubr.f32.mxu0 0.0
        %573 = vmatmul.mubr.f32.gmra.mxu0 %v455
        %v574 = vpop.f32.mrf.mxu0
        %v575 = vadd.f32 %v382, %v574
        %v576 = vpop.f32.mrf.mxu0
        %577 = vmatprep.mubr.f32.mxu0 0.0
        %578 = vmatmul.mubr.f32.gmra.mxu0 %v458
        %v579 = vpop.f32.mrf.mxu0
        %v580 = vadd.f32 %v387, %v579
        %v581 = vpop.f32.mrf.mxu0
        %582 = vmatprep.mubr.f32.mxu0 0.0
        %583 = vmatmul.mubr.f32.gmra.mxu0 %v461
        %v584 = vpop.f32.mrf.mxu0
        %v585 = vadd.f32 %v392, %v584
        %v586 = vpop.f32.mrf.mxu0
        %587 = vmatprep.mubr.f32.mxu0 0.0
        %588 = vmatmul.mubr.f32.gmra.mxu0 %v464
        %v589 = vpop.f32.mrf.mxu0
        %v590 = vadd.f32 %v397, %v589
        %v591 = vpop.f32.mrf.mxu0
        %592 = vmatprep.mubr.f32.mxu0 0.0
        %593 = vmatmul.mubr.f32.gmra.mxu0 %v467
        %v594 = vpop.f32.mrf.mxu0
        %v595 = vadd.f32 %v402, %v594
        %v596 = vpop.f32.mrf.mxu0
        %597 = vmatprep.mubr.f32.mxu0 0.0
        %598 = vmatmul.mubr.f32.gmra.mxu0 %v470
        %v599 = vpop.f32.mrf.mxu0
        %v600 = vadd.f32 %v407, %v599
        %v601 = vpop.f32.mrf.mxu0
        %602 = vmatprep.mubr.f32.mxu0 0.0
        %603 = vmatmul.mubr.f32.gmra.mxu0 %v473
        %v604 = vpop.f32.mrf.mxu0
        %v605 = vadd.f32 %v412, %v604
        %v606 = vpop.f32.mrf.mxu0
        %607 = vmatprep.mubr.f32.mxu0 0.0
        %608 = vmatmul.mubr.f32.gmra.mxu0 %v476
        %v609 = vpop.f32.mrf.mxu0
        %v610 = vadd.f32 %v417, %v609
        %v611 = vpop.f32.mrf.mxu0
        %612 = vmatprep.mubr.f32.mxu0 0.0
        %613 = vmatmul.mubr.f32.gmra.mxu0 %v479
        %v614 = vpop.f32.mrf.mxu0
        %v615 = vadd.f32 %v422, %v614
        %v616 = vpop.f32.mrf.mxu0
        %617 = vmatprep.mubr.f32.mxu0 0.0
        %618 = vmatmul.mubr.f32.gmra.mxu0 %v482
        %v619 = vpop.f32.mrf.mxu0
        %v620 = vadd.f32 %v427, %v619
        %v621 = vpop.f32.mrf.mxu0
        %622 = vmatprep.mubr.f32.mxu0 0.0
        %623 = vmatmul.mubr.f32.gmra.mxu0 %v485
        %v624 = vpop.f32.mrf.mxu0
        %v625 = vadd.f32 %v432, %v624
        %v626 = vpop.f32.mrf.mxu0
        %627 = vmatprep.mubr.f32.mxu0 0.0
        %628 = vmatmul.mubr.f32.gmra.mxu0 %v488
        %v629 = vpop.f32.mrf.mxu0
        %v630 = vadd.f32 %v437, %v629
        %v631 = vpop.f32.mrf.mxu0
        %632 = vmatprep.mubr.f32.mxu0 0.0
        %633 = vmatmul.mubr.f32.gmra.mxu0 %v491
        %v634 = vpop.f32.mrf.mxu0
        %v635 = vadd.f32 %v442, %v634
        %v636 = vpop.f32.mrf.mxu0
        %637 = vdwg.mxu0
        %v638 = vld [vmem:[%s213 + $0x2] sm:$0xff]
        %v639 = vld [vmem:[%s213 + $0xa] sm:$0xff]
        %v640 = vld [vmem:[%s213 + $0x1a] sm:$0xff]
        %v641 = vld [vmem:[%s213 + $0x22] sm:$0xff]
        %v642 = vld [vmem:[%s213 + $0x32] sm:$0xff]
        %v643 = vld [vmem:[%s213 + $0x3a] sm:$0xff]
        %v644 = vld [vmem:[%s213 + $0x4a] sm:$0xff]
        %v645 = vld [vmem:[%s213 + $0x52] sm:$0xff]
        %v646 = vld [vmem:[%s213 + $0x62] sm:$0xff]
        %v647 = vld [vmem:[%s213 + $0x6a] sm:$0xff]
        %v648 = vld [vmem:[%s213 + $0x7a] sm:$0xff]
        %v649 = vld [vmem:[%s213 + $0x82] sm:$0xff]
        %v650 = vld [vmem:[%s213 + $0x92] sm:$0xff]
        %v651 = vld [vmem:[%s213 + $0x9a] sm:$0xff]
        %v652 = vld [vmem:[%s213 + $0xaa] sm:$0xff]
        %v653 = vld [vmem:[%s213 + $0xb2] sm:$0xff]
        %s654 = scalar_lea.vmem %s1, 32
        %v655 = vld [vmem:[%s654] sm:$0xff]
        %v656 = vld [vmem:[%s654 + $0x8] sm:$0xff]
        %v658 = vsel %vm251, %v638, 0
        %v661 = vsel %vm251, %v639, 0
        %v664 = vsel %vm251, %v640, 0
        %v667 = vsel %vm251, %v641, 0
        %v670 = vsel %vm251, %v642, 0
        %v673 = vsel %vm251, %v643, 0
        %v676 = vsel %vm251, %v644, 0
        %v679 = vsel %vm251, %v645, 0
        %v682 = vsel %vm251, %v646, 0
        %v685 = vsel %vm251, %v647, 0
        %v688 = vsel %vm251, %v648, 0
        %v691 = vsel %vm251, %v649, 0
        %v694 = vsel %vm251, %v650, 0
        %v697 = vsel %vm251, %v651, 0
        %v700 = vsel %vm251, %v652, 0
        %v703 = vsel %vm251, %v653, 0
        %705 = vmatprep.subr.mxu0 0.0
        %706 = vmatpush1.msra.mxu0 0.0
        %707 = vmatprep.subr.mxu0 0.0
        %708 = vmatpush1.msra.mxu0 0.0
        %709 = vmatprep.subr.mxu0 0.0
        %710 = vmatpush1.msra.mxu0 0.0
        %711 = vmatprep.subr.mxu0 0.0
        %712 = vmatpush1.msra.mxu0 0.0
        %713 = vmatprep.subr.mxu0 0.0
        %714 = vmatpush1.msra.mxu0 0.0
        %715 = vmatprep.subr.mxu0 0.0
        %716 = vmatpush1.msra.mxu0 0.0
        %717 = vmatprep.subr.mxu0 0.0
        %718 = vmatpush1.msra.mxu0 0.0
        %719 = vmatprep.subr.mxu0 0.0
        %720 = vmatpush1.msra.mxu0 0.0
        %721 = vmatprep.subr.mxu0 0.0
        %722 = vmatpush1.msra.mxu0 0.0
        %723 = vmatprep.subr.mxu0 0.0
        %724 = vmatpush1.msra.mxu0 0.0
        %725 = vmatprep.subr.mxu0 0.0
        %726 = vmatpush1.msra.mxu0 0.0
        %727 = vmatprep.subr.mxu0 0.0
        %728 = vmatpush1.msra.mxu0 0.0
        %729 = vmatprep.subr.mxu0 0.0
        %730 = vmatpush1.msra.mxu0 0.0
        %731 = vmatprep.subr.mxu0 0.0
        %732 = vmatpush1.msra.mxu0 0.0
        %733 = vmatprep.subr.mxu0 0.0
        %734 = vmatpush1.msra.mxu0 %v656
        %735 = vmatprep.subr.mxu0 0.0
        %736 = vmatpush1.msra.mxu0 %v655
        %737 = vmatprep.subr.mxu0 0.0
        %738 = vmatpush2.msra.mxu0 0.0
        %739 = vmatprep.subr.mxu0 0.0
        %740 = vmatpush2.msra.mxu0 0.0
        %741 = vmatprep.subr.mxu0 0.0
        %742 = vmatpush2.msra.mxu0 0.0
        %743 = vmatprep.subr.mxu0 0.0
        %744 = vmatpush2.msra.mxu0 0.0
        %745 = vmatprep.subr.mxu0 0.0
        %746 = vmatpush2.msra.mxu0 0.0
        %747 = vmatprep.subr.mxu0 0.0
        %748 = vmatpush2.msra.mxu0 0.0
        %749 = vmatprep.subr.mxu0 0.0
        %750 = vmatpush2.msra.mxu0 0.0
        %751 = vmatprep.subr.mxu0 0.0
        %752 = vmatpush2.msra.mxu0 0.0
        %753 = vmatprep.subr.mxu0 0.0
        %754 = vmatpush2.msra.mxu0 0.0
        %755 = vmatprep.subr.mxu0 0.0
        %756 = vmatpush2.msra.mxu0 0.0
        %757 = vmatprep.subr.mxu0 0.0
        %758 = vmatpush2.msra.mxu0 0.0
        %759 = vmatprep.subr.mxu0 0.0
        %760 = vmatpush2.msra.mxu0 0.0
        %761 = vmatprep.subr.mxu0 0.0
        %762 = vmatpush2.msra.mxu0 0.0
        %763 = vmatprep.subr.mxu0 0.0
        %764 = vmatpush2.msra.mxu0 0.0
        %765 = vmatprep.subr.mxu0 0.0
        %766 = vmatpush2.msra.mxu0 0.0
        %767 = vmatprep.subr.mxu0 0.0
        %768 = vmatpush2.msra.mxu0 0.0
        %769 = vmatprep.mubr.f32.mxu0 0.0
        %770 = vmatmul.mubr.f32.gmra.mxu0 %v658
        %v771 = vpop.f32.mrf.mxu0
        %v772 = vadd.f32 0.0, %v771
        %v773 = vpop.f32.mrf.mxu0
        %774 = vmatprep.mubr.f32.mxu0 0.0
        %775 = vmatmul.mubr.f32.gmra.mxu0 %v661
        %v776 = vpop.f32.mrf.mxu0
        %v777 = vadd.f32 0.0, %v776
        %v778 = vpop.f32.mrf.mxu0
        %779 = vmatprep.mubr.f32.mxu0 0.0
        %780 = vmatmul.mubr.f32.gmra.mxu0 %v664
        %v781 = vpop.f32.mrf.mxu0
        %v782 = vadd.f32 0.0, %v781
        %v783 = vpop.f32.mrf.mxu0
        %784 = vmatprep.mubr.f32.mxu0 0.0
        %785 = vmatmul.mubr.f32.gmra.mxu0 %v667
        %v786 = vpop.f32.mrf.mxu0
        %v787 = vadd.f32 0.0, %v786
        %v788 = vpop.f32.mrf.mxu0
        %789 = vmatprep.mubr.f32.mxu0 0.0
        %790 = vmatmul.mubr.f32.gmra.mxu0 %v670
        %v791 = vpop.f32.mrf.mxu0
        %v792 = vadd.f32 0.0, %v791
        %v793 = vpop.f32.mrf.mxu0
        %794 = vmatprep.mubr.f32.mxu0 0.0
        %795 = vmatmul.mubr.f32.gmra.mxu0 %v673
        %v796 = vpop.f32.mrf.mxu0
        %v797 = vadd.f32 0.0, %v796
        %v798 = vpop.f32.mrf.mxu0
        %799 = vmatprep.mubr.f32.mxu0 0.0
        %800 = vmatmul.mubr.f32.gmra.mxu0 %v676
        %v801 = vpop.f32.mrf.mxu0
        %v802 = vadd.f32 0.0, %v801
        %v803 = vpop.f32.mrf.mxu0
        %804 = vmatprep.mubr.f32.mxu0 0.0
        %805 = vmatmul.mubr.f32.gmra.mxu0 %v679
        %v806 = vpop.f32.mrf.mxu0
        %v807 = vadd.f32 0.0, %v806
        %v808 = vpop.f32.mrf.mxu0
        %809 = vmatprep.mubr.f32.mxu0 0.0
        %810 = vmatmul.mubr.f32.gmra.mxu0 %v682
        %v811 = vpop.f32.mrf.mxu0
        %v812 = vadd.f32 0.0, %v811
        %v813 = vpop.f32.mrf.mxu0
        %814 = vmatprep.mubr.f32.mxu0 0.0
        %815 = vmatmul.mubr.f32.gmra.mxu0 %v685
        %v816 = vpop.f32.mrf.mxu0
        %v817 = vadd.f32 0.0, %v816
        %v818 = vpop.f32.mrf.mxu0
        %819 = vmatprep.mubr.f32.mxu0 0.0
        %820 = vmatmul.mubr.f32.gmra.mxu0 %v688
        %v821 = vpop.f32.mrf.mxu0
        %v822 = vadd.f32 0.0, %v821
        %v823 = vpop.f32.mrf.mxu0
        %824 = vmatprep.mubr.f32.mxu0 0.0
        %825 = vmatmul.mubr.f32.gmra.mxu0 %v691
        %v826 = vpop.f32.mrf.mxu0
        %v827 = vadd.f32 0.0, %v826
        %v828 = vpop.f32.mrf.mxu0
        %829 = vmatprep.mubr.f32.mxu0 0.0
        %830 = vmatmul.mubr.f32.gmra.mxu0 %v694
        %v831 = vpop.f32.mrf.mxu0
        %v832 = vadd.f32 0.0, %v831
        %v833 = vpop.f32.mrf.mxu0
        %834 = vmatprep.mubr.f32.mxu0 0.0
        %835 = vmatmul.mubr.f32.gmra.mxu0 %v697
        %v836 = vpop.f32.mrf.mxu0
        %v837 = vadd.f32 0.0, %v836
        %v838 = vpop.f32.mrf.mxu0
        %839 = vmatprep.mubr.f32.mxu0 0.0
        %840 = vmatmul.mubr.f32.gmra.mxu0 %v700
        %v841 = vpop.f32.mrf.mxu0
        %v842 = vadd.f32 0.0, %v841
        %v843 = vpop.f32.mrf.mxu0
        %844 = vmatprep.mubr.f32.mxu0 0.0
        %845 = vmatmul.mubr.f32.gmra.mxu0 %v703
        %v846 = vpop.f32.mrf.mxu0
        %v847 = vadd.f32 0.0, %v846
        %v848 = vpop.f32.mrf.mxu0
        %849 = vdwg.mxu0
        %v850 = vadd.f32 %v560, %v772
        %v851 = vadd.f32 %v565, %v777
        %v852 = vadd.f32 %v570, %v782
        %v853 = vadd.f32 %v575, %v787
        %v854 = vadd.f32 %v580, %v792
        %v855 = vadd.f32 %v585, %v797
        %v856 = vadd.f32 %v590, %v802
        %v857 = vadd.f32 %v595, %v807
        %v858 = vadd.f32 %v600, %v812
        %v859 = vadd.f32 %v605, %v817
        %v860 = vadd.f32 %v610, %v822
        %v861 = vadd.f32 %v615, %v827
        %v862 = vadd.f32 %v620, %v832
        %v863 = vadd.f32 %v625, %v837
        %v864 = vadd.f32 %v630, %v842
        %v865 = vadd.f32 %v635, %v847
        %s866 = sadd.s32 %s211, 1
        %s867 = smul.u32 %s866, 24
        %s868 = scalar_lea.vmem %s209, %s867
        %v869 = vld [vmem:[%s868] sm:$0xff]
        %v870 = vld [vmem:[%s868 + $0x8] sm:$0xff]
        %v871 = vld [vmem:[%s868 + $0x18] sm:$0xff]
        %v872 = vld [vmem:[%s868 + $0x20] sm:$0xff]
        %v873 = vld [vmem:[%s868 + $0x30] sm:$0xff]
        %v874 = vld [vmem:[%s868 + $0x38] sm:$0xff]
        %v875 = vld [vmem:[%s868 + $0x48] sm:$0xff]
        %v876 = vld [vmem:[%s868 + $0x50] sm:$0xff]
        %v877 = vld [vmem:[%s868 + $0x60] sm:$0xff]
        %v878 = vld [vmem:[%s868 + $0x68] sm:$0xff]
        %v879 = vld [vmem:[%s868 + $0x78] sm:$0xff]
        %v880 = vld [vmem:[%s868 + $0x80] sm:$0xff]
        %v881 = vld [vmem:[%s868 + $0x90] sm:$0xff]
        %v882 = vld [vmem:[%s868 + $0x98] sm:$0xff]
        %v883 = vld [vmem:[%s868 + $0xa8] sm:$0xff]
        %v884 = vld [vmem:[%s868 + $0xb0] sm:$0xff]
        %s885 = scalar_lea.vmem %s1, 48
        %v886 = vld [vmem:[%s885] sm:$0xff]
        %v887 = vld [vmem:[%s885 + $0x8] sm:$0xff]
        %v889 = vsel %vm251, %v869, 0
        %v892 = vsel %vm251, %v870, 0
        %v895 = vsel %vm251, %v871, 0
        %v898 = vsel %vm251, %v872, 0
        %v901 = vsel %vm251, %v873, 0
        %v904 = vsel %vm251, %v874, 0
        %v907 = vsel %vm251, %v875, 0
        %v910 = vsel %vm251, %v876, 0
        %v913 = vsel %vm251, %v877, 0
        %v916 = vsel %vm251, %v878, 0
        %v919 = vsel %vm251, %v879, 0
        %v922 = vsel %vm251, %v880, 0
        %v925 = vsel %vm251, %v881, 0
        %v928 = vsel %vm251, %v882, 0
        %v931 = vsel %vm251, %v883, 0
        %v934 = vsel %vm251, %v884, 0
        %936 = vmatprep.subr.mxu0 0.0
        %937 = vmatpush1.msra.mxu0 0.0
        %938 = vmatprep.subr.mxu0 0.0
        %939 = vmatpush1.msra.mxu0 0.0
        %940 = vmatprep.subr.mxu0 0.0
        %941 = vmatpush1.msra.mxu0 0.0
        %942 = vmatprep.subr.mxu0 0.0
        %943 = vmatpush1.msra.mxu0 0.0
        %944 = vmatprep.subr.mxu0 0.0
        %945 = vmatpush1.msra.mxu0 0.0
        %946 = vmatprep.subr.mxu0 0.0
        %947 = vmatpush1.msra.mxu0 0.0
        %948 = vmatprep.subr.mxu0 0.0
        %949 = vmatpush1.msra.mxu0 0.0
        %950 = vmatprep.subr.mxu0 0.0
        %951 = vmatpush1.msra.mxu0 0.0
        %952 = vmatprep.subr.mxu0 0.0
        %953 = vmatpush1.msra.mxu0 0.0
        %954 = vmatprep.subr.mxu0 0.0
        %955 = vmatpush1.msra.mxu0 0.0
        %956 = vmatprep.subr.mxu0 0.0
        %957 = vmatpush1.msra.mxu0 0.0
        %958 = vmatprep.subr.mxu0 0.0
        %959 = vmatpush1.msra.mxu0 0.0
        %960 = vmatprep.subr.mxu0 0.0
        %961 = vmatpush1.msra.mxu0 0.0
        %962 = vmatprep.subr.mxu0 0.0
        %963 = vmatpush1.msra.mxu0 0.0
        %964 = vmatprep.subr.mxu0 0.0
        %965 = vmatpush1.msra.mxu0 %v887
        %966 = vmatprep.subr.mxu0 0.0
        %967 = vmatpush1.msra.mxu0 %v886
        %968 = vmatprep.subr.mxu0 0.0
        %969 = vmatpush2.msra.mxu0 0.0
        %970 = vmatprep.subr.mxu0 0.0
        %971 = vmatpush2.msra.mxu0 0.0
        %972 = vmatprep.subr.mxu0 0.0
        %973 = vmatpush2.msra.mxu0 0.0
        %974 = vmatprep.subr.mxu0 0.0
        %975 = vmatpush2.msra.mxu0 0.0
        %976 = vmatprep.subr.mxu0 0.0
        %977 = vmatpush2.msra.mxu0 0.0
        %978 = vmatprep.subr.mxu0 0.0
        %979 = vmatpush2.msra.mxu0 0.0
        %980 = vmatprep.subr.mxu0 0.0
        %981 = vmatpush2.msra.mxu0 0.0
        %982 = vmatprep.subr.mxu0 0.0
        %983 = vmatpush2.msra.mxu0 0.0
        %984 = vmatprep.subr.mxu0 0.0
        %985 = vmatpush2.msra.mxu0 0.0
        %986 = vmatprep.subr.mxu0 0.0
        %987 = vmatpush2.msra.mxu0 0.0
        %988 = vmatprep.subr.mxu0 0.0
        %989 = vmatpush2.msra.mxu0 0.0
        %990 = vmatprep.subr.mxu0 0.0
        %991 = vmatpush2.msra.mxu0 0.0
        %992 = vmatprep.subr.mxu0 0.0
        %993 = vmatpush2.msra.mxu0 0.0
        %994 = vmatprep.subr.mxu0 0.0
        %995 = vmatpush2.msra.mxu0 0.0
        %996 = vmatprep.subr.mxu0 0.0
        %997 = vmatpush2.msra.mxu0 0.0
        %998 = vmatprep.subr.mxu0 0.0
        %999 = vmatpush2.msra.mxu0 0.0
        %1000 = vmatprep.mubr.f32.mxu0 0.0
        %1001 = vmatmul.mubr.f32.gmra.mxu0 %v889
        %v1002 = vpop.f32.mrf.mxu0
        %v1003 = vadd.f32 0.0, %v1002
        %v1004 = vpop.f32.mrf.mxu0
        %1005 = vmatprep.mubr.f32.mxu0 0.0
        %1006 = vmatmul.mubr.f32.gmra.mxu0 %v892
        %v1007 = vpop.f32.mrf.mxu0
        %v1008 = vadd.f32 0.0, %v1007
        %v1009 = vpop.f32.mrf.mxu0
        %1010 = vmatprep.mubr.f32.mxu0 0.0
        %1011 = vmatmul.mubr.f32.gmra.mxu0 %v895
        %v1012 = vpop.f32.mrf.mxu0
        %v1013 = vadd.f32 0.0, %v1012
        %v1014 = vpop.f32.mrf.mxu0
        %1015 = vmatprep.mubr.f32.mxu0 0.0
        %1016 = vmatmul.mubr.f32.gmra.mxu0 %v898
        %v1017 = vpop.f32.mrf.mxu0
        %v1018 = vadd.f32 0.0, %v1017
        %v1019 = vpop.f32.mrf.mxu0
        %1020 = vmatprep.mubr.f32.mxu0 0.0
        %1021 = vmatmul.mubr.f32.gmra.mxu0 %v901
        %v1022 = vpop.f32.mrf.mxu0
        %v1023 = vadd.f32 0.0, %v1022
        %v1024 = vpop.f32.mrf.mxu0
        %1025 = vmatprep.mubr.f32.mxu0 0.0
        %1026 = vmatmul.mubr.f32.gmra.mxu0 %v904
        %v1027 = vpop.f32.mrf.mxu0
        %v1028 = vadd.f32 0.0, %v1027
        %v1029 = vpop.f32.mrf.mxu0
        %1030 = vmatprep.mubr.f32.mxu0 0.0
        %1031 = vmatmul.mubr.f32.gmra.mxu0 %v907
        %v1032 = vpop.f32.mrf.mxu0
        %v1033 = vadd.f32 0.0, %v1032
        %v1034 = vpop.f32.mrf.mxu0
        %1035 = vmatprep.mubr.f32.mxu0 0.0
        %1036 = vmatmul.mubr.f32.gmra.mxu0 %v910
        %v1037 = vpop.f32.mrf.mxu0
        %v1038 = vadd.f32 0.0, %v1037
        %v1039 = vpop.f32.mrf.mxu0
        %1040 = vmatprep.mubr.f32.mxu0 0.0
        %1041 = vmatmul.mubr.f32.gmra.mxu0 %v913
        %v1042 = vpop.f32.mrf.mxu0
        %v1043 = vadd.f32 0.0, %v1042
        %v1044 = vpop.f32.mrf.mxu0
        %1045 = vmatprep.mubr.f32.mxu0 0.0
        %1046 = vmatmul.mubr.f32.gmra.mxu0 %v916
        %v1047 = vpop.f32.mrf.mxu0
        %v1048 = vadd.f32 0.0, %v1047
        %v1049 = vpop.f32.mrf.mxu0
        %1050 = vmatprep.mubr.f32.mxu0 0.0
        %1051 = vmatmul.mubr.f32.gmra.mxu0 %v919
        %v1052 = vpop.f32.mrf.mxu0
        %v1053 = vadd.f32 0.0, %v1052
        %v1054 = vpop.f32.mrf.mxu0
        %1055 = vmatprep.mubr.f32.mxu0 0.0
        %1056 = vmatmul.mubr.f32.gmra.mxu0 %v922
        %v1057 = vpop.f32.mrf.mxu0
        %v1058 = vadd.f32 0.0, %v1057
        %v1059 = vpop.f32.mrf.mxu0
        %1060 = vmatprep.mubr.f32.mxu0 0.0
        %1061 = vmatmul.mubr.f32.gmra.mxu0 %v925
        %v1062 = vpop.f32.mrf.mxu0
        %v1063 = vadd.f32 0.0, %v1062
        %v1064 = vpop.f32.mrf.mxu0
        %1065 = vmatprep.mubr.f32.mxu0 0.0
        %1066 = vmatmul.mubr.f32.gmra.mxu0 %v928
        %v1067 = vpop.f32.mrf.mxu0
        %v1068 = vadd.f32 0.0, %v1067
        %v1069 = vpop.f32.mrf.mxu0
        %1070 = vmatprep.mubr.f32.mxu0 0.0
        %1071 = vmatmul.mubr.f32.gmra.mxu0 %v931
        %v1072 = vpop.f32.mrf.mxu0
        %v1073 = vadd.f32 0.0, %v1072
        %v1074 = vpop.f32.mrf.mxu0
        %1075 = vmatprep.mubr.f32.mxu0 0.0
        %1076 = vmatmul.mubr.f32.gmra.mxu0 %v934
        %v1077 = vpop.f32.mrf.mxu0
        %v1078 = vadd.f32 0.0, %v1077
        %v1079 = vpop.f32.mrf.mxu0
        %1080 = vdwg.mxu0
        %v1081 = vadd.f32 %v850, %v1003
        %v1082 = vadd.f32 %v851, %v1008
        %v1083 = vadd.f32 %v852, %v1013
        %v1084 = vadd.f32 %v853, %v1018
        %v1085 = vadd.f32 %v854, %v1023
        %v1086 = vadd.f32 %v855, %v1028
        %v1087 = vadd.f32 %v856, %v1033
        %v1088 = vadd.f32 %v857, %v1038
        %v1089 = vadd.f32 %v858, %v1043
        %v1090 = vadd.f32 %v859, %v1048
        %v1091 = vadd.f32 %v860, %v1053
        %v1092 = vadd.f32 %v861, %v1058
        %v1093 = vadd.f32 %v862, %v1063
        %v1094 = vadd.f32 %v863, %v1068
        %v1095 = vadd.f32 %v864, %v1073
        %v1096 = vadd.f32 %v865, %v1078
        %v1097 = vld [vmem:[%s868 + $0x1] sm:$0xff]
        %v1098 = vld [vmem:[%s868 + $0x9] sm:$0xff]
        %v1099 = vld [vmem:[%s868 + $0x19] sm:$0xff]
        %v1100 = vld [vmem:[%s868 + $0x21] sm:$0xff]
        %v1101 = vld [vmem:[%s868 + $0x31] sm:$0xff]
        %v1102 = vld [vmem:[%s868 + $0x39] sm:$0xff]
        %v1103 = vld [vmem:[%s868 + $0x49] sm:$0xff]
        %v1104 = vld [vmem:[%s868 + $0x51] sm:$0xff]
        %v1105 = vld [vmem:[%s868 + $0x61] sm:$0xff]
        %v1106 = vld [vmem:[%s868 + $0x69] sm:$0xff]
        %v1107 = vld [vmem:[%s868 + $0x79] sm:$0xff]
        %v1108 = vld [vmem:[%s868 + $0x81] sm:$0xff]
        %v1109 = vld [vmem:[%s868 + $0x91] sm:$0xff]
        %v1110 = vld [vmem:[%s868 + $0x99] sm:$0xff]
        %v1111 = vld [vmem:[%s868 + $0xa9] sm:$0xff]
        %v1112 = vld [vmem:[%s868 + $0xb1] sm:$0xff]
        %s1113 = scalar_lea.vmem %s1, 64
        %v1114 = vld [vmem:[%s1113] sm:$0xff]
        %v1115 = vld [vmem:[%s1113 + $0x8] sm:$0xff]
        %v1117 = vsel %vm251, %v1097, 0
        %v1120 = vsel %vm251, %v1098, 0
        %v1123 = vsel %vm251, %v1099, 0
        %v1126 = vsel %vm251, %v1100, 0
        %v1129 = vsel %vm251, %v1101, 0
        %v1132 = vsel %vm251, %v1102, 0
        %v1135 = vsel %vm251, %v1103, 0
        %v1138 = vsel %vm251, %v1104, 0
        %v1141 = vsel %vm251, %v1105, 0
        %v1144 = vsel %vm251, %v1106, 0
        %v1147 = vsel %vm251, %v1107, 0
        %v1150 = vsel %vm251, %v1108, 0
        %v1153 = vsel %vm251, %v1109, 0
        %v1156 = vsel %vm251, %v1110, 0
        %v1159 = vsel %vm251, %v1111, 0
        %v1162 = vsel %vm251, %v1112, 0
        %1164 = vmatprep.subr.mxu0 0.0
        %1165 = vmatpush1.msra.mxu0 0.0
        %1166 = vmatprep.subr.mxu0 0.0
        %1167 = vmatpush1.msra.mxu0 0.0
        %1168 = vmatprep.subr.mxu0 0.0
        %1169 = vmatpush1.msra.mxu0 0.0
        %1170 = vmatprep.subr.mxu0 0.0
        %1171 = vmatpush1.msra.mxu0 0.0
        %1172 = vmatprep.subr.mxu0 0.0
        %1173 = vmatpush1.msra.mxu0 0.0
        %1174 = vmatprep.subr.mxu0 0.0
        %1175 = vmatpush1.msra.mxu0 0.0
        %1176 = vmatprep.subr.mxu0 0.0
        %1177 = vmatpush1.msra.mxu0 0.0
        %1178 = vmatprep.subr.mxu0 0.0
        %1179 = vmatpush1.msra.mxu0 0.0
        %1180 = vmatprep.subr.mxu0 0.0
        %1181 = vmatpush1.msra.mxu0 0.0
        %1182 = vmatprep.subr.mxu0 0.0
        %1183 = vmatpush1.msra.mxu0 0.0
        %1184 = vmatprep.subr.mxu0 0.0
        %1185 = vmatpush1.msra.mxu0 0.0
        %1186 = vmatprep.subr.mxu0 0.0
        %1187 = vmatpush1.msra.mxu0 0.0
        %1188 = vmatprep.subr.mxu0 0.0
        %1189 = vmatpush1.msra.mxu0 0.0
        %1190 = vmatprep.subr.mxu0 0.0
        %1191 = vmatpush1.msra.mxu0 0.0
        %1192 = vmatprep.subr.mxu0 0.0
        %1193 = vmatpush1.msra.mxu0 %v1115
        %1194 = vmatprep.subr.mxu0 0.0
        %1195 = vmatpush1.msra.mxu0 %v1114
        %1196 = vmatprep.subr.mxu0 0.0
        %1197 = vmatpush2.msra.mxu0 0.0
        %1198 = vmatprep.subr.mxu0 0.0
        %1199 = vmatpush2.msra.mxu0 0.0
        %1200 = vmatprep.subr.mxu0 0.0
        %1201 = vmatpush2.msra.mxu0 0.0
        %1202 = vmatprep.subr.mxu0 0.0
        %1203 = vmatpush2.msra.mxu0 0.0
        %1204 = vmatprep.subr.mxu0 0.0
        %1205 = vmatpush2.msra.mxu0 0.0
        %1206 = vmatprep.subr.mxu0 0.0
        %1207 = vmatpush2.msra.mxu0 0.0
        %1208 = vmatprep.subr.mxu0 0.0
        %1209 = vmatpush2.msra.mxu0 0.0
        %1210 = vmatprep.subr.mxu0 0.0
        %1211 = vmatpush2.msra.mxu0 0.0
        %1212 = vmatprep.subr.mxu0 0.0
        %1213 = vmatpush2.msra.mxu0 0.0
        %1214 = vmatprep.subr.mxu0 0.0
        %1215 = vmatpush2.msra.mxu0 0.0
        %1216 = vmatprep.subr.mxu0 0.0
        %1217 = vmatpush2.msra.mxu0 0.0
        %1218 = vmatprep.subr.mxu0 0.0
        %1219 = vmatpush2.msra.mxu0 0.0
        %1220 = vmatprep.subr.mxu0 0.0
        %1221 = vmatpush2.msra.mxu0 0.0
        %1222 = vmatprep.subr.mxu0 0.0
        %1223 = vmatpush2.msra.mxu0 0.0
        %1224 = vmatprep.subr.mxu0 0.0
        %1225 = vmatpush2.msra.mxu0 0.0
        %1226 = vmatprep.subr.mxu0 0.0
        %1227 = vmatpush2.msra.mxu0 0.0
        %1228 = vmatprep.mubr.f32.mxu0 0.0
        %1229 = vmatmul.mubr.f32.gmra.mxu0 %v1117
        %v1230 = vpop.f32.mrf.mxu0
        %v1231 = vadd.f32 0.0, %v1230
        %v1232 = vpop.f32.mrf.mxu0
        %1233 = vmatprep.mubr.f32.mxu0 0.0
        %1234 = vmatmul.mubr.f32.gmra.mxu0 %v1120
        %v1235 = vpop.f32.mrf.mxu0
        %v1236 = vadd.f32 0.0, %v1235
        %v1237 = vpop.f32.mrf.mxu0
        %1238 = vmatprep.mubr.f32.mxu0 0.0
        %1239 = vmatmul.mubr.f32.gmra.mxu0 %v1123
        %v1240 = vpop.f32.mrf.mxu0
        %v1241 = vadd.f32 0.0, %v1240
        %v1242 = vpop.f32.mrf.mxu0
        %1243 = vmatprep.mubr.f32.mxu0 0.0
        %1244 = vmatmul.mubr.f32.gmra.mxu0 %v1126
        %v1245 = vpop.f32.mrf.mxu0
        %v1246 = vadd.f32 0.0, %v1245
        %v1247 = vpop.f32.mrf.mxu0
        %1248 = vmatprep.mubr.f32.mxu0 0.0
        %1249 = vmatmul.mubr.f32.gmra.mxu0 %v1129
        %v1250 = vpop.f32.mrf.mxu0
        %v1251 = vadd.f32 0.0, %v1250
        %v1252 = vpop.f32.mrf.mxu0
        %1253 = vmatprep.mubr.f32.mxu0 0.0
        %1254 = vmatmul.mubr.f32.gmra.mxu0 %v1132
        %v1255 = vpop.f32.mrf.mxu0
        %v1256 = vadd.f32 0.0, %v1255
        %v1257 = vpop.f32.mrf.mxu0
        %1258 = vmatprep.mubr.f32.mxu0 0.0
        %1259 = vmatmul.mubr.f32.gmra.mxu0 %v1135
        %v1260 = vpop.f32.mrf.mxu0
        %v1261 = vadd.f32 0.0, %v1260
        %v1262 = vpop.f32.mrf.mxu0
        %1263 = vmatprep.mubr.f32.mxu0 0.0
        %1264 = vmatmul.mubr.f32.gmra.mxu0 %v1138
        %v1265 = vpop.f32.mrf.mxu0
        %v1266 = vadd.f32 0.0, %v1265
        %v1267 = vpop.f32.mrf.mxu0
        %1268 = vmatprep.mubr.f32.mxu0 0.0
        %1269 = vmatmul.mubr.f32.gmra.mxu0 %v1141
        %v1270 = vpop.f32.mrf.mxu0
        %v1271 = vadd.f32 0.0, %v1270
        %v1272 = vpop.f32.mrf.mxu0
        %1273 = vmatprep.mubr.f32.mxu0 0.0
        %1274 = vmatmul.mubr.f32.gmra.mxu0 %v1144
        %v1275 = vpop.f32.mrf.mxu0
        %v1276 = vadd.f32 0.0, %v1275
        %v1277 = vpop.f32.mrf.mxu0
        %1278 = vmatprep.mubr.f32.mxu0 0.0
        %1279 = vmatmul.mubr.f32.gmra.mxu0 %v1147
        %v1280 = vpop.f32.mrf.mxu0
        %v1281 = vadd.f32 0.0, %v1280
        %v1282 = vpop.f32.mrf.mxu0
        %1283 = vmatprep.mubr.f32.mxu0 0.0
        %1284 = vmatmul.mubr.f32.gmra.mxu0 %v1150
        %v1285 = vpop.f32.mrf.mxu0
        %v1286 = vadd.f32 0.0, %v1285
        %v1287 = vpop.f32.mrf.mxu0
        %1288 = vmatprep.mubr.f32.mxu0 0.0
        %1289 = vmatmul.mubr.f32.gmra.mxu0 %v1153
        %v1290 = vpop.f32.mrf.mxu0
        %v1291 = vadd.f32 0.0, %v1290
        %v1292 = vpop.f32.mrf.mxu0
        %1293 = vmatprep.mubr.f32.mxu0 0.0
        %1294 = vmatmul.mubr.f32.gmra.mxu0 %v1156
        %v1295 = vpop.f32.mrf.mxu0
        %v1296 = vadd.f32 0.0, %v1295
        %v1297 = vpop.f32.mrf.mxu0
        %1298 = vmatprep.mubr.f32.mxu0 0.0
        %1299 = vmatmul.mubr.f32.gmra.mxu0 %v1159
        %v1300 = vpop.f32.mrf.mxu0
        %v1301 = vadd.f32 0.0, %v1300
        %v1302 = vpop.f32.mrf.mxu0
        %1303 = vmatprep.mubr.f32.mxu0 0.0
        %1304 = vmatmul.mubr.f32.gmra.mxu0 %v1162
        %v1305 = vpop.f32.mrf.mxu0
        %v1306 = vadd.f32 0.0, %v1305
        %v1307 = vpop.f32.mrf.mxu0
        %1308 = vdwg.mxu0
        %v1309 = vadd.f32 %v1081, %v1231
        %v1310 = vadd.f32 %v1082, %v1236
        %v1311 = vadd.f32 %v1083, %v1241
        %v1312 = vadd.f32 %v1084, %v1246
        %v1313 = vadd.f32 %v1085, %v1251
        %v1314 = vadd.f32 %v1086, %v1256
        %v1315 = vadd.f32 %v1087, %v1261
        %v1316 = vadd.f32 %v1088, %v1266
        %v1317 = vadd.f32 %v1089, %v1271
        %v1318 = vadd.f32 %v1090, %v1276
        %v1319 = vadd.f32 %v1091, %v1281
        %v1320 = vadd.f32 %v1092, %v1286
        %v1321 = vadd.f32 %v1093, %v1291
        %v1322 = vadd.f32 %v1094, %v1296
        %v1323 = vadd.f32 %v1095, %v1301
        %v1324 = vadd.f32 %v1096, %v1306
        %v1325 = vld [vmem:[%s868 + $0x2] sm:$0xff]
        %v1326 = vld [vmem:[%s868 + $0xa] sm:$0xff]
        %v1327 = vld [vmem:[%s868 + $0x1a] sm:$0xff]
        %v1328 = vld [vmem:[%s868 + $0x22] sm:$0xff]
        %v1329 = vld [vmem:[%s868 + $0x32] sm:$0xff]
        %v1330 = vld [vmem:[%s868 + $0x3a] sm:$0xff]
        %v1331 = vld [vmem:[%s868 + $0x4a] sm:$0xff]
        %v1332 = vld [vmem:[%s868 + $0x52] sm:$0xff]
        %v1333 = vld [vmem:[%s868 + $0x62] sm:$0xff]
        %v1334 = vld [vmem:[%s868 + $0x6a] sm:$0xff]
        %v1335 = vld [vmem:[%s868 + $0x7a] sm:$0xff]
        %v1336 = vld [vmem:[%s868 + $0x82] sm:$0xff]
        %v1337 = vld [vmem:[%s868 + $0x92] sm:$0xff]
        %v1338 = vld [vmem:[%s868 + $0x9a] sm:$0xff]
        %v1339 = vld [vmem:[%s868 + $0xaa] sm:$0xff]
        %v1340 = vld [vmem:[%s868 + $0xb2] sm:$0xff]
        %s1341 = scalar_lea.vmem %s1, 80
        %v1342 = vld [vmem:[%s1341] sm:$0xff]
        %v1343 = vld [vmem:[%s1341 + $0x8] sm:$0xff]
        %v1345 = vsel %vm251, %v1325, 0
        %v1348 = vsel %vm251, %v1326, 0
        %v1351 = vsel %vm251, %v1327, 0
        %v1354 = vsel %vm251, %v1328, 0
        %v1357 = vsel %vm251, %v1329, 0
        %v1360 = vsel %vm251, %v1330, 0
        %v1363 = vsel %vm251, %v1331, 0
        %v1366 = vsel %vm251, %v1332, 0
        %v1369 = vsel %vm251, %v1333, 0
        %v1372 = vsel %vm251, %v1334, 0
        %v1375 = vsel %vm251, %v1335, 0
        %v1378 = vsel %vm251, %v1336, 0
        %v1381 = vsel %vm251, %v1337, 0
        %v1384 = vsel %vm251, %v1338, 0
        %v1387 = vsel %vm251, %v1339, 0
        %v1390 = vsel %vm251, %v1340, 0
        %1392 = vmatprep.subr.mxu0 0.0
        %1393 = vmatpush1.msra.mxu0 0.0
        %1394 = vmatprep.subr.mxu0 0.0
        %1395 = vmatpush1.msra.mxu0 0.0
        %1396 = vmatprep.subr.mxu0 0.0
        %1397 = vmatpush1.msra.mxu0 0.0
        %1398 = vmatprep.subr.mxu0 0.0
        %1399 = vmatpush1.msra.mxu0 0.0
        %1400 = vmatprep.subr.mxu0 0.0
        %1401 = vmatpush1.msra.mxu0 0.0
        %1402 = vmatprep.subr.mxu0 0.0
        %1403 = vmatpush1.msra.mxu0 0.0
        %1404 = vmatprep.subr.mxu0 0.0
        %1405 = vmatpush1.msra.mxu0 0.0
        %1406 = vmatprep.subr.mxu0 0.0
        %1407 = vmatpush1.msra.mxu0 0.0
        %1408 = vmatprep.subr.mxu0 0.0
        %1409 = vmatpush1.msra.mxu0 0.0
        %1410 = vmatprep.subr.mxu0 0.0
        %1411 = vmatpush1.msra.mxu0 0.0
        %1412 = vmatprep.subr.mxu0 0.0
        %1413 = vmatpush1.msra.mxu0 0.0
        %1414 = vmatprep.subr.mxu0 0.0
        %1415 = vmatpush1.msra.mxu0 0.0
        %1416 = vmatprep.subr.mxu0 0.0
        %1417 = vmatpush1.msra.mxu0 0.0
        %1418 = vmatprep.subr.mxu0 0.0
        %1419 = vmatpush1.msra.mxu0 0.0
        %1420 = vmatprep.subr.mxu0 0.0
        %1421 = vmatpush1.msra.mxu0 %v1343
        %1422 = vmatprep.subr.mxu0 0.0
        %1423 = vmatpush1.msra.mxu0 %v1342
        %1424 = vmatprep.subr.mxu0 0.0
        %1425 = vmatpush2.msra.mxu0 0.0
        %1426 = vmatprep.subr.mxu0 0.0
        %1427 = vmatpush2.msra.mxu0 0.0
        %1428 = vmatprep.subr.mxu0 0.0
        %1429 = vmatpush2.msra.mxu0 0.0
        %1430 = vmatprep.subr.mxu0 0.0
        %1431 = vmatpush2.msra.mxu0 0.0
        %1432 = vmatprep.subr.mxu0 0.0
        %1433 = vmatpush2.msra.mxu0 0.0
        %1434 = vmatprep.subr.mxu0 0.0
        %1435 = vmatpush2.msra.mxu0 0.0
        %1436 = vmatprep.subr.mxu0 0.0
        %1437 = vmatpush2.msra.mxu0 0.0
        %1438 = vmatprep.subr.mxu0 0.0
        %1439 = vmatpush2.msra.mxu0 0.0
        %1440 = vmatprep.subr.mxu0 0.0
        %1441 = vmatpush2.msra.mxu0 0.0
        %1442 = vmatprep.subr.mxu0 0.0
        %1443 = vmatpush2.msra.mxu0 0.0
        %1444 = vmatprep.subr.mxu0 0.0
        %1445 = vmatpush2.msra.mxu0 0.0
        %1446 = vmatprep.subr.mxu0 0.0
        %1447 = vmatpush2.msra.mxu0 0.0
        %1448 = vmatprep.subr.mxu0 0.0
        %1449 = vmatpush2.msra.mxu0 0.0
        %1450 = vmatprep.subr.mxu0 0.0
        %1451 = vmatpush2.msra.mxu0 0.0
        %1452 = vmatprep.subr.mxu0 0.0
        %1453 = vmatpush2.msra.mxu0 0.0
        %1454 = vmatprep.subr.mxu0 0.0
        %1455 = vmatpush2.msra.mxu0 0.0
        %1456 = vmatprep.mubr.f32.mxu0 0.0
        %1457 = vmatmul.mubr.f32.gmra.mxu0 %v1345
        %v1458 = vpop.f32.mrf.mxu0
        %v1459 = vadd.f32 0.0, %v1458
        %v1460 = vpop.f32.mrf.mxu0
        %1461 = vmatprep.mubr.f32.mxu0 0.0
        %1462 = vmatmul.mubr.f32.gmra.mxu0 %v1348
        %v1463 = vpop.f32.mrf.mxu0
        %v1464 = vadd.f32 0.0, %v1463
        %v1465 = vpop.f32.mrf.mxu0
        %1466 = vmatprep.mubr.f32.mxu0 0.0
        %1467 = vmatmul.mubr.f32.gmra.mxu0 %v1351
        %v1468 = vpop.f32.mrf.mxu0
        %v1469 = vadd.f32 0.0, %v1468
        %v1470 = vpop.f32.mrf.mxu0
        %1471 = vmatprep.mubr.f32.mxu0 0.0
        %1472 = vmatmul.mubr.f32.gmra.mxu0 %v1354
        %v1473 = vpop.f32.mrf.mxu0
        %v1474 = vadd.f32 0.0, %v1473
        %v1475 = vpop.f32.mrf.mxu0
        %1476 = vmatprep.mubr.f32.mxu0 0.0
        %1477 = vmatmul.mubr.f32.gmra.mxu0 %v1357
        %v1478 = vpop.f32.mrf.mxu0
        %v1479 = vadd.f32 0.0, %v1478
        %v1480 = vpop.f32.mrf.mxu0
        %1481 = vmatprep.mubr.f32.mxu0 0.0
        %1482 = vmatmul.mubr.f32.gmra.mxu0 %v1360
        %v1483 = vpop.f32.mrf.mxu0
        %v1484 = vadd.f32 0.0, %v1483
        %v1485 = vpop.f32.mrf.mxu0
        %1486 = vmatprep.mubr.f32.mxu0 0.0
        %1487 = vmatmul.mubr.f32.gmra.mxu0 %v1363
        %v1488 = vpop.f32.mrf.mxu0
        %v1489 = vadd.f32 0.0, %v1488
        %v1490 = vpop.f32.mrf.mxu0
        %1491 = vmatprep.mubr.f32.mxu0 0.0
        %1492 = vmatmul.mubr.f32.gmra.mxu0 %v1366
        %v1493 = vpop.f32.mrf.mxu0
        %v1494 = vadd.f32 0.0, %v1493
        %v1495 = vpop.f32.mrf.mxu0
        %1496 = vmatprep.mubr.f32.mxu0 0.0
        %1497 = vmatmul.mubr.f32.gmra.mxu0 %v1369
        %v1498 = vpop.f32.mrf.mxu0
        %v1499 = vadd.f32 0.0, %v1498
        %v1500 = vpop.f32.mrf.mxu0
        %1501 = vmatprep.mubr.f32.mxu0 0.0
        %1502 = vmatmul.mubr.f32.gmra.mxu0 %v1372
        %v1503 = vpop.f32.mrf.mxu0
        %v1504 = vadd.f32 0.0, %v1503
        %v1505 = vpop.f32.mrf.mxu0
        %1506 = vmatprep.mubr.f32.mxu0 0.0
        %1507 = vmatmul.mubr.f32.gmra.mxu0 %v1375
        %v1508 = vpop.f32.mrf.mxu0
        %v1509 = vadd.f32 0.0, %v1508
        %v1510 = vpop.f32.mrf.mxu0
        %1511 = vmatprep.mubr.f32.mxu0 0.0
        %1512 = vmatmul.mubr.f32.gmra.mxu0 %v1378
        %v1513 = vpop.f32.mrf.mxu0
        %v1514 = vadd.f32 0.0, %v1513
        %v1515 = vpop.f32.mrf.mxu0
        %1516 = vmatprep.mubr.f32.mxu0 0.0
        %1517 = vmatmul.mubr.f32.gmra.mxu0 %v1381
        %v1518 = vpop.f32.mrf.mxu0
        %v1519 = vadd.f32 0.0, %v1518
        %v1520 = vpop.f32.mrf.mxu0
        %1521 = vmatprep.mubr.f32.mxu0 0.0
        %1522 = vmatmul.mubr.f32.gmra.mxu0 %v1384
        %v1523 = vpop.f32.mrf.mxu0
        %v1524 = vadd.f32 0.0, %v1523
        %v1525 = vpop.f32.mrf.mxu0
        %1526 = vmatprep.mubr.f32.mxu0 0.0
        %1527 = vmatmul.mubr.f32.gmra.mxu0 %v1387
        %v1528 = vpop.f32.mrf.mxu0
        %v1529 = vadd.f32 0.0, %v1528
        %v1530 = vpop.f32.mrf.mxu0
        %1531 = vmatprep.mubr.f32.mxu0 0.0
        %1532 = vmatmul.mubr.f32.gmra.mxu0 %v1390
        %v1533 = vpop.f32.mrf.mxu0
        %v1534 = vadd.f32 0.0, %v1533
        %v1535 = vpop.f32.mrf.mxu0
        %1536 = vdwg.mxu0
        %v1537 = vadd.f32 %v1309, %v1459
        %v1538 = vadd.f32 %v1310, %v1464
        %v1539 = vadd.f32 %v1311, %v1469
        %v1540 = vadd.f32 %v1312, %v1474
        %v1541 = vadd.f32 %v1313, %v1479
        %v1542 = vadd.f32 %v1314, %v1484
        %v1543 = vadd.f32 %v1315, %v1489
        %v1544 = vadd.f32 %v1316, %v1494
        %v1545 = vadd.f32 %v1317, %v1499
        %v1546 = vadd.f32 %v1318, %v1504
        %v1547 = vadd.f32 %v1319, %v1509
        %v1548 = vadd.f32 %v1320, %v1514
        %v1549 = vadd.f32 %v1321, %v1519
        %v1550 = vadd.f32 %v1322, %v1524
        %v1551 = vadd.f32 %v1323, %v1529
        %v1552 = vadd.f32 %v1324, %v1534
        %s1553 = sadd.s32 %s211, 2
        %s1554 = smul.u32 %s1553, 24
        %s1555 = scalar_lea.vmem %s209, %s1554
        %v1556 = vld [vmem:[%s1555] sm:$0xff]
        %v1557 = vld [vmem:[%s1555 + $0x8] sm:$0xff]
        %v1558 = vld [vmem:[%s1555 + $0x18] sm:$0xff]
        %v1559 = vld [vmem:[%s1555 + $0x20] sm:$0xff]
        %v1560 = vld [vmem:[%s1555 + $0x30] sm:$0xff]
        %v1561 = vld [vmem:[%s1555 + $0x38] sm:$0xff]
        %v1562 = vld [vmem:[%s1555 + $0x48] sm:$0xff]
        %v1563 = vld [vmem:[%s1555 + $0x50] sm:$0xff]
        %v1564 = vld [vmem:[%s1555 + $0x60] sm:$0xff]
        %v1565 = vld [vmem:[%s1555 + $0x68] sm:$0xff]
        %v1566 = vld [vmem:[%s1555 + $0x78] sm:$0xff]
        %v1567 = vld [vmem:[%s1555 + $0x80] sm:$0xff]
        %v1568 = vld [vmem:[%s1555 + $0x90] sm:$0xff]
        %v1569 = vld [vmem:[%s1555 + $0x98] sm:$0xff]
        %v1570 = vld [vmem:[%s1555 + $0xa8] sm:$0xff]
        %v1571 = vld [vmem:[%s1555 + $0xb0] sm:$0xff]
        %s1572 = scalar_lea.vmem %s1, 96
        %v1573 = vld [vmem:[%s1572] sm:$0xff]
        %v1574 = vld [vmem:[%s1572 + $0x8] sm:$0xff]
        %v1576 = vsel %vm251, %v1556, 0
        %v1579 = vsel %vm251, %v1557, 0
        %v1582 = vsel %vm251, %v1558, 0
        %v1585 = vsel %vm251, %v1559, 0
        %v1588 = vsel %vm251, %v1560, 0
        %v1591 = vsel %vm251, %v1561, 0
        %v1594 = vsel %vm251, %v1562, 0
        %v1597 = vsel %vm251, %v1563, 0
        %v1600 = vsel %vm251, %v1564, 0
        %v1603 = vsel %vm251, %v1565, 0
        %v1606 = vsel %vm251, %v1566, 0
        %v1609 = vsel %vm251, %v1567, 0
        %v1612 = vsel %vm251, %v1568, 0
        %v1615 = vsel %vm251, %v1569, 0
        %v1618 = vsel %vm251, %v1570, 0
        %v1621 = vsel %vm251, %v1571, 0
        %1623 = vmatprep.subr.mxu0 0.0
        %1624 = vmatpush1.msra.mxu0 0.0
        %1625 = vmatprep.subr.mxu0 0.0
        %1626 = vmatpush1.msra.mxu0 0.0
        %1627 = vmatprep.subr.mxu0 0.0
        %1628 = vmatpush1.msra.mxu0 0.0
        %1629 = vmatprep.subr.mxu0 0.0
        %1630 = vmatpush1.msra.mxu0 0.0
        %1631 = vmatprep.subr.mxu0 0.0
        %1632 = vmatpush1.msra.mxu0 0.0
        %1633 = vmatprep.subr.mxu0 0.0
        %1634 = vmatpush1.msra.mxu0 0.0
        %1635 = vmatprep.subr.mxu0 0.0
        %1636 = vmatpush1.msra.mxu0 0.0
        %1637 = vmatprep.subr.mxu0 0.0
        %1638 = vmatpush1.msra.mxu0 0.0
        %1639 = vmatprep.subr.mxu0 0.0
        %1640 = vmatpush1.msra.mxu0 0.0
        %1641 = vmatprep.subr.mxu0 0.0
        %1642 = vmatpush1.msra.mxu0 0.0
        %1643 = vmatprep.subr.mxu0 0.0
        %1644 = vmatpush1.msra.mxu0 0.0
        %1645 = vmatprep.subr.mxu0 0.0
        %1646 = vmatpush1.msra.mxu0 0.0
        %1647 = vmatprep.subr.mxu0 0.0
        %1648 = vmatpush1.msra.mxu0 0.0
        %1649 = vmatprep.subr.mxu0 0.0
        %1650 = vmatpush1.msra.mxu0 0.0
        %1651 = vmatprep.subr.mxu0 0.0
        %1652 = vmatpush1.msra.mxu0 %v1574
        %1653 = vmatprep.subr.mxu0 0.0
        %1654 = vmatpush1.msra.mxu0 %v1573
        %1655 = vmatprep.subr.mxu0 0.0
        %1656 = vmatpush2.msra.mxu0 0.0
        %1657 = vmatprep.subr.mxu0 0.0
        %1658 = vmatpush2.msra.mxu0 0.0
        %1659 = vmatprep.subr.mxu0 0.0
        %1660 = vmatpush2.msra.mxu0 0.0
        %1661 = vmatprep.subr.mxu0 0.0
        %1662 = vmatpush2.msra.mxu0 0.0
        %1663 = vmatprep.subr.mxu0 0.0
        %1664 = vmatpush2.msra.mxu0 0.0
        %1665 = vmatprep.subr.mxu0 0.0
        %1666 = vmatpush2.msra.mxu0 0.0
        %1667 = vmatprep.subr.mxu0 0.0
        %1668 = vmatpush2.msra.mxu0 0.0
        %1669 = vmatprep.subr.mxu0 0.0
        %1670 = vmatpush2.msra.mxu0 0.0
        %1671 = vmatprep.subr.mxu0 0.0
        %1672 = vmatpush2.msra.mxu0 0.0
        %1673 = vmatprep.subr.mxu0 0.0
        %1674 = vmatpush2.msra.mxu0 0.0
        %1675 = vmatprep.subr.mxu0 0.0
        %1676 = vmatpush2.msra.mxu0 0.0
        %1677 = vmatprep.subr.mxu0 0.0
        %1678 = vmatpush2.msra.mxu0 0.0
        %1679 = vmatprep.subr.mxu0 0.0
        %1680 = vmatpush2.msra.mxu0 0.0
        %1681 = vmatprep.subr.mxu0 0.0
        %1682 = vmatpush2.msra.mxu0 0.0
        %1683 = vmatprep.subr.mxu0 0.0
        %1684 = vmatpush2.msra.mxu0 0.0
        %1685 = vmatprep.subr.mxu0 0.0
        %1686 = vmatpush2.msra.mxu0 0.0
        %1687 = vmatprep.mubr.f32.mxu0 0.0
        %1688 = vmatmul.mubr.f32.gmra.mxu0 %v1576
        %v1689 = vpop.f32.mrf.mxu0
        %v1690 = vadd.f32 0.0, %v1689
        %v1691 = vpop.f32.mrf.mxu0
        %1692 = vmatprep.mubr.f32.mxu0 0.0
        %1693 = vmatmul.mubr.f32.gmra.mxu0 %v1579
        %v1694 = vpop.f32.mrf.mxu0
        %v1695 = vadd.f32 0.0, %v1694
        %v1696 = vpop.f32.mrf.mxu0
        %1697 = vmatprep.mubr.f32.mxu0 0.0
        %1698 = vmatmul.mubr.f32.gmra.mxu0 %v1582
        %v1699 = vpop.f32.mrf.mxu0
        %v1700 = vadd.f32 0.0, %v1699
        %v1701 = vpop.f32.mrf.mxu0
        %1702 = vmatprep.mubr.f32.mxu0 0.0
        %1703 = vmatmul.mubr.f32.gmra.mxu0 %v1585
        %v1704 = vpop.f32.mrf.mxu0
        %v1705 = vadd.f32 0.0, %v1704
        %v1706 = vpop.f32.mrf.mxu0
        %1707 = vmatprep.mubr.f32.mxu0 0.0
        %1708 = vmatmul.mubr.f32.gmra.mxu0 %v1588
        %v1709 = vpop.f32.mrf.mxu0
        %v1710 = vadd.f32 0.0, %v1709
        %v1711 = vpop.f32.mrf.mxu0
        %1712 = vmatprep.mubr.f32.mxu0 0.0
        %1713 = vmatmul.mubr.f32.gmra.mxu0 %v1591
        %v1714 = vpop.f32.mrf.mxu0
        %v1715 = vadd.f32 0.0, %v1714
        %v1716 = vpop.f32.mrf.mxu0
        %1717 = vmatprep.mubr.f32.mxu0 0.0
        %1718 = vmatmul.mubr.f32.gmra.mxu0 %v1594
        %v1719 = vpop.f32.mrf.mxu0
        %v1720 = vadd.f32 0.0, %v1719
        %v1721 = vpop.f32.mrf.mxu0
        %1722 = vmatprep.mubr.f32.mxu0 0.0
        %1723 = vmatmul.mubr.f32.gmra.mxu0 %v1597
        %v1724 = vpop.f32.mrf.mxu0
        %v1725 = vadd.f32 0.0, %v1724
        %v1726 = vpop.f32.mrf.mxu0
        %1727 = vmatprep.mubr.f32.mxu0 0.0
        %1728 = vmatmul.mubr.f32.gmra.mxu0 %v1600
        %v1729 = vpop.f32.mrf.mxu0
        %v1730 = vadd.f32 0.0, %v1729
        %v1731 = vpop.f32.mrf.mxu0
        %1732 = vmatprep.mubr.f32.mxu0 0.0
        %1733 = vmatmul.mubr.f32.gmra.mxu0 %v1603
        %v1734 = vpop.f32.mrf.mxu0
        %v1735 = vadd.f32 0.0, %v1734
        %v1736 = vpop.f32.mrf.mxu0
        %1737 = vmatprep.mubr.f32.mxu0 0.0
        %1738 = vmatmul.mubr.f32.gmra.mxu0 %v1606
        %v1739 = vpop.f32.mrf.mxu0
        %v1740 = vadd.f32 0.0, %v1739
        %v1741 = vpop.f32.mrf.mxu0
        %1742 = vmatprep.mubr.f32.mxu0 0.0
        %1743 = vmatmul.mubr.f32.gmra.mxu0 %v1609
        %v1744 = vpop.f32.mrf.mxu0
        %v1745 = vadd.f32 0.0, %v1744
        %v1746 = vpop.f32.mrf.mxu0
        %1747 = vmatprep.mubr.f32.mxu0 0.0
        %1748 = vmatmul.mubr.f32.gmra.mxu0 %v1612
        %v1749 = vpop.f32.mrf.mxu0
        %v1750 = vadd.f32 0.0, %v1749
        %v1751 = vpop.f32.mrf.mxu0
        %1752 = vmatprep.mubr.f32.mxu0 0.0
        %1753 = vmatmul.mubr.f32.gmra.mxu0 %v1615
        %v1754 = vpop.f32.mrf.mxu0
        %v1755 = vadd.f32 0.0, %v1754
        %v1756 = vpop.f32.mrf.mxu0
        %1757 = vmatprep.mubr.f32.mxu0 0.0
        %1758 = vmatmul.mubr.f32.gmra.mxu0 %v1618
        %v1759 = vpop.f32.mrf.mxu0
        %v1760 = vadd.f32 0.0, %v1759
        %v1761 = vpop.f32.mrf.mxu0
        %1762 = vmatprep.mubr.f32.mxu0 0.0
        %1763 = vmatmul.mubr.f32.gmra.mxu0 %v1621
        %v1764 = vpop.f32.mrf.mxu0
        %v1765 = vadd.f32 0.0, %v1764
        %v1766 = vpop.f32.mrf.mxu0
        %1767 = vdwg.mxu0
        %v1768 = vadd.f32 %v1537, %v1690
        %v1769 = vadd.f32 %v1538, %v1695
        %v1770 = vadd.f32 %v1539, %v1700
        %v1771 = vadd.f32 %v1540, %v1705
        %v1772 = vadd.f32 %v1541, %v1710
        %v1773 = vadd.f32 %v1542, %v1715
        %v1774 = vadd.f32 %v1543, %v1720
        %v1775 = vadd.f32 %v1544, %v1725
        %v1776 = vadd.f32 %v1545, %v1730
        %v1777 = vadd.f32 %v1546, %v1735
        %v1778 = vadd.f32 %v1547, %v1740
        %v1779 = vadd.f32 %v1548, %v1745
        %v1780 = vadd.f32 %v1549, %v1750
        %v1781 = vadd.f32 %v1550, %v1755
        %v1782 = vadd.f32 %v1551, %v1760
        %v1783 = vadd.f32 %v1552, %v1765
        %v1784 = vld [vmem:[%s1555 + $0x1] sm:$0xff]
        %v1785 = vld [vmem:[%s1555 + $0x9] sm:$0xff]
        %v1786 = vld [vmem:[%s1555 + $0x19] sm:$0xff]
        %v1787 = vld [vmem:[%s1555 + $0x21] sm:$0xff]
        %v1788 = vld [vmem:[%s1555 + $0x31] sm:$0xff]
        %v1789 = vld [vmem:[%s1555 + $0x39] sm:$0xff]
        %v1790 = vld [vmem:[%s1555 + $0x49] sm:$0xff]
        %v1791 = vld [vmem:[%s1555 + $0x51] sm:$0xff]
        %v1792 = vld [vmem:[%s1555 + $0x61] sm:$0xff]
        %v1793 = vld [vmem:[%s1555 + $0x69] sm:$0xff]
        %v1794 = vld [vmem:[%s1555 + $0x79] sm:$0xff]
        %v1795 = vld [vmem:[%s1555 + $0x81] sm:$0xff]
        %v1796 = vld [vmem:[%s1555 + $0x91] sm:$0xff]
        %v1797 = vld [vmem:[%s1555 + $0x99] sm:$0xff]
        %v1798 = vld [vmem:[%s1555 + $0xa9] sm:$0xff]
        %v1799 = vld [vmem:[%s1555 + $0xb1] sm:$0xff]
        %s1800 = scalar_lea.vmem %s1, 112
        %v1801 = vld [vmem:[%s1800] sm:$0xff]
        %v1802 = vld [vmem:[%s1800 + $0x8] sm:$0xff]
        %v1804 = vsel %vm251, %v1784, 0
        %v1807 = vsel %vm251, %v1785, 0
        %v1810 = vsel %vm251, %v1786, 0
        %v1813 = vsel %vm251, %v1787, 0
        %v1816 = vsel %vm251, %v1788, 0
        %v1819 = vsel %vm251, %v1789, 0
        %v1822 = vsel %vm251, %v1790, 0
        %v1825 = vsel %vm251, %v1791, 0
        %v1828 = vsel %vm251, %v1792, 0
        %v1831 = vsel %vm251, %v1793, 0
        %v1834 = vsel %vm251, %v1794, 0
        %v1837 = vsel %vm251, %v1795, 0
        %v1840 = vsel %vm251, %v1796, 0
        %v1843 = vsel %vm251, %v1797, 0
        %v1846 = vsel %vm251, %v1798, 0
        %v1849 = vsel %vm251, %v1799, 0
        %1851 = vmatprep.subr.mxu0 0.0
        %1852 = vmatpush1.msra.mxu0 0.0
        %1853 = vmatprep.subr.mxu0 0.0
        %1854 = vmatpush1.msra.mxu0 0.0
        %1855 = vmatprep.subr.mxu0 0.0
        %1856 = vmatpush1.msra.mxu0 0.0
        %1857 = vmatprep.subr.mxu0 0.0
        %1858 = vmatpush1.msra.mxu0 0.0
        %1859 = vmatprep.subr.mxu0 0.0
        %1860 = vmatpush1.msra.mxu0 0.0
        %1861 = vmatprep.subr.mxu0 0.0
        %1862 = vmatpush1.msra.mxu0 0.0
        %1863 = vmatprep.subr.mxu0 0.0
        %1864 = vmatpush1.msra.mxu0 0.0
        %1865 = vmatprep.subr.mxu0 0.0
        %1866 = vmatpush1.msra.mxu0 0.0
        %1867 = vmatprep.subr.mxu0 0.0
        %1868 = vmatpush1.msra.mxu0 0.0
        %1869 = vmatprep.subr.mxu0 0.0
        %1870 = vmatpush1.msra.mxu0 0.0
        %1871 = vmatprep.subr.mxu0 0.0
        %1872 = vmatpush1.msra.mxu0 0.0
        %1873 = vmatprep.subr.mxu0 0.0
        %1874 = vmatpush1.msra.mxu0 0.0
        %1875 = vmatprep.subr.mxu0 0.0
        %1876 = vmatpush1.msra.mxu0 0.0
        %1877 = vmatprep.subr.mxu0 0.0
        %1878 = vmatpush1.msra.mxu0 0.0
        %1879 = vmatprep.subr.mxu0 0.0
        %1880 = vmatpush1.msra.mxu0 %v1802
        %1881 = vmatprep.subr.mxu0 0.0
        %1882 = vmatpush1.msra.mxu0 %v1801
        %1883 = vmatprep.subr.mxu0 0.0
        %1884 = vmatpush2.msra.mxu0 0.0
        %1885 = vmatprep.subr.mxu0 0.0
        %1886 = vmatpush2.msra.mxu0 0.0
        %1887 = vmatprep.subr.mxu0 0.0
        %1888 = vmatpush2.msra.mxu0 0.0
        %1889 = vmatprep.subr.mxu0 0.0
        %1890 = vmatpush2.msra.mxu0 0.0
        %1891 = vmatprep.subr.mxu0 0.0
        %1892 = vmatpush2.msra.mxu0 0.0
        %1893 = vmatprep.subr.mxu0 0.0
        %1894 = vmatpush2.msra.mxu0 0.0
        %1895 = vmatprep.subr.mxu0 0.0
        %1896 = vmatpush2.msra.mxu0 0.0
        %1897 = vmatprep.subr.mxu0 0.0
        %1898 = vmatpush2.msra.mxu0 0.0
        %1899 = vmatprep.subr.mxu0 0.0
        %1900 = vmatpush2.msra.mxu0 0.0
        %1901 = vmatprep.subr.mxu0 0.0
        %1902 = vmatpush2.msra.mxu0 0.0
        %1903 = vmatprep.subr.mxu0 0.0
        %1904 = vmatpush2.msra.mxu0 0.0
        %1905 = vmatprep.subr.mxu0 0.0
        %1906 = vmatpush2.msra.mxu0 0.0
        %1907 = vmatprep.subr.mxu0 0.0
        %1908 = vmatpush2.msra.mxu0 0.0
        %1909 = vmatprep.subr.mxu0 0.0
        %1910 = vmatpush2.msra.mxu0 0.0
        %1911 = vmatprep.subr.mxu0 0.0
        %1912 = vmatpush2.msra.mxu0 0.0
        %1913 = vmatprep.subr.mxu0 0.0
        %1914 = vmatpush2.msra.mxu0 0.0
        %1915 = vmatprep.mubr.f32.mxu0 0.0
        %1916 = vmatmul.mubr.f32.gmra.mxu0 %v1804
        %v1917 = vpop.f32.mrf.mxu0
        %v1918 = vadd.f32 0.0, %v1917
        %v1919 = vpop.f32.mrf.mxu0
        %1920 = vmatprep.mubr.f32.mxu0 0.0
        %1921 = vmatmul.mubr.f32.gmra.mxu0 %v1807
        %v1922 = vpop.f32.mrf.mxu0
        %v1923 = vadd.f32 0.0, %v1922
        %v1924 = vpop.f32.mrf.mxu0
        %1925 = vmatprep.mubr.f32.mxu0 0.0
        %1926 = vmatmul.mubr.f32.gmra.mxu0 %v1810
        %v1927 = vpop.f32.mrf.mxu0
        %v1928 = vadd.f32 0.0, %v1927
        %v1929 = vpop.f32.mrf.mxu0
        %1930 = vmatprep.mubr.f32.mxu0 0.0
        %1931 = vmatmul.mubr.f32.gmra.mxu0 %v1813
        %v1932 = vpop.f32.mrf.mxu0
        %v1933 = vadd.f32 0.0, %v1932
        %v1934 = vpop.f32.mrf.mxu0
        %1935 = vmatprep.mubr.f32.mxu0 0.0
        %1936 = vmatmul.mubr.f32.gmra.mxu0 %v1816
        %v1937 = vpop.f32.mrf.mxu0
        %v1938 = vadd.f32 0.0, %v1937
        %v1939 = vpop.f32.mrf.mxu0
        %1940 = vmatprep.mubr.f32.mxu0 0.0
        %1941 = vmatmul.mubr.f32.gmra.mxu0 %v1819
        %v1942 = vpop.f32.mrf.mxu0
        %v1943 = vadd.f32 0.0, %v1942
        %v1944 = vpop.f32.mrf.mxu0
        %1945 = vmatprep.mubr.f32.mxu0 0.0
        %1946 = vmatmul.mubr.f32.gmra.mxu0 %v1822
        %v1947 = vpop.f32.mrf.mxu0
        %v1948 = vadd.f32 0.0, %v1947
        %v1949 = vpop.f32.mrf.mxu0
        %1950 = vmatprep.mubr.f32.mxu0 0.0
        %1951 = vmatmul.mubr.f32.gmra.mxu0 %v1825
        %v1952 = vpop.f32.mrf.mxu0
        %v1953 = vadd.f32 0.0, %v1952
        %v1954 = vpop.f32.mrf.mxu0
        %1955 = vmatprep.mubr.f32.mxu0 0.0
        %1956 = vmatmul.mubr.f32.gmra.mxu0 %v1828
        %v1957 = vpop.f32.mrf.mxu0
        %v1958 = vadd.f32 0.0, %v1957
        %v1959 = vpop.f32.mrf.mxu0
        %1960 = vmatprep.mubr.f32.mxu0 0.0
        %1961 = vmatmul.mubr.f32.gmra.mxu0 %v1831
        %v1962 = vpop.f32.mrf.mxu0
        %v1963 = vadd.f32 0.0, %v1962
        %v1964 = vpop.f32.mrf.mxu0
        %1965 = vmatprep.mubr.f32.mxu0 0.0
        %1966 = vmatmul.mubr.f32.gmra.mxu0 %v1834
        %v1967 = vpop.f32.mrf.mxu0
        %v1968 = vadd.f32 0.0, %v1967
        %v1969 = vpop.f32.mrf.mxu0
        %1970 = vmatprep.mubr.f32.mxu0 0.0
        %1971 = vmatmul.mubr.f32.gmra.mxu0 %v1837
        %v1972 = vpop.f32.mrf.mxu0
        %v1973 = vadd.f32 0.0, %v1972
        %v1974 = vpop.f32.mrf.mxu0
        %1975 = vmatprep.mubr.f32.mxu0 0.0
        %1976 = vmatmul.mubr.f32.gmra.mxu0 %v1840
        %v1977 = vpop.f32.mrf.mxu0
        %v1978 = vadd.f32 0.0, %v1977
        %v1979 = vpop.f32.mrf.mxu0
        %1980 = vmatprep.mubr.f32.mxu0 0.0
        %1981 = vmatmul.mubr.f32.gmra.mxu0 %v1843
        %v1982 = vpop.f32.mrf.mxu0
        %v1983 = vadd.f32 0.0, %v1982
        %v1984 = vpop.f32.mrf.mxu0
        %1985 = vmatprep.mubr.f32.mxu0 0.0
        %1986 = vmatmul.mubr.f32.gmra.mxu0 %v1846
        %v1987 = vpop.f32.mrf.mxu0
        %v1988 = vadd.f32 0.0, %v1987
        %v1989 = vpop.f32.mrf.mxu0
        %1990 = vmatprep.mubr.f32.mxu0 0.0
        %1991 = vmatmul.mubr.f32.gmra.mxu0 %v1849
        %v1992 = vpop.f32.mrf.mxu0
        %v1993 = vadd.f32 0.0, %v1992
        %v1994 = vpop.f32.mrf.mxu0
        %1995 = vdwg.mxu0
        %v1996 = vadd.f32 %v1768, %v1918
        %v1997 = vadd.f32 %v1769, %v1923
        %v1998 = vadd.f32 %v1770, %v1928
        %v1999 = vadd.f32 %v1771, %v1933
        %v2000 = vadd.f32 %v1772, %v1938
        %v2001 = vadd.f32 %v1773, %v1943
        %v2002 = vadd.f32 %v1774, %v1948
        %v2003 = vadd.f32 %v1775, %v1953
        %v2004 = vadd.f32 %v1776, %v1958
        %v2005 = vadd.f32 %v1777, %v1963
        %v2006 = vadd.f32 %v1778, %v1968
        %v2007 = vadd.f32 %v1779, %v1973
        %v2008 = vadd.f32 %v1780, %v1978
        %v2009 = vadd.f32 %v1781, %v1983
        %v2010 = vadd.f32 %v1782, %v1988
        %v2011 = vadd.f32 %v1783, %v1993
        %v2012 = vld [vmem:[%s1555 + $0x2] sm:$0xff]
        %v2013 = vld [vmem:[%s1555 + $0xa] sm:$0xff]
        %v2014 = vld [vmem:[%s1555 + $0x1a] sm:$0xff]
        %v2015 = vld [vmem:[%s1555 + $0x22] sm:$0xff]
        %v2016 = vld [vmem:[%s1555 + $0x32] sm:$0xff]
        %v2017 = vld [vmem:[%s1555 + $0x3a] sm:$0xff]
        %v2018 = vld [vmem:[%s1555 + $0x4a] sm:$0xff]
        %v2019 = vld [vmem:[%s1555 + $0x52] sm:$0xff]
        %v2020 = vld [vmem:[%s1555 + $0x62] sm:$0xff]
        %v2021 = vld [vmem:[%s1555 + $0x6a] sm:$0xff]
        %v2022 = vld [vmem:[%s1555 + $0x7a] sm:$0xff]
        %v2023 = vld [vmem:[%s1555 + $0x82] sm:$0xff]
        %v2024 = vld [vmem:[%s1555 + $0x92] sm:$0xff]
        %v2025 = vld [vmem:[%s1555 + $0x9a] sm:$0xff]
        %v2026 = vld [vmem:[%s1555 + $0xaa] sm:$0xff]
        %v2027 = vld [vmem:[%s1555 + $0xb2] sm:$0xff]
        %s2028 = scalar_lea.vmem %s1, 128
        %v2029 = vld [vmem:[%s2028] sm:$0xff]
        %v2030 = vld [vmem:[%s2028 + $0x8] sm:$0xff]
        %v2032 = vsel %vm251, %v2012, 0
        %v2035 = vsel %vm251, %v2013, 0
        %v2038 = vsel %vm251, %v2014, 0
        %v2041 = vsel %vm251, %v2015, 0
        %v2044 = vsel %vm251, %v2016, 0
        %v2047 = vsel %vm251, %v2017, 0
        %v2050 = vsel %vm251, %v2018, 0
        %v2053 = vsel %vm251, %v2019, 0
        %v2056 = vsel %vm251, %v2020, 0
        %v2059 = vsel %vm251, %v2021, 0
        %v2062 = vsel %vm251, %v2022, 0
        %v2065 = vsel %vm251, %v2023, 0
        %v2068 = vsel %vm251, %v2024, 0
        %v2071 = vsel %vm251, %v2025, 0
        %v2074 = vsel %vm251, %v2026, 0
        %v2077 = vsel %vm251, %v2027, 0
        %2079 = vmatprep.subr.mxu0 0.0
        %2080 = vmatpush1.msra.mxu0 0.0
        %2081 = vmatprep.subr.mxu0 0.0
        %2082 = vmatpush1.msra.mxu0 0.0
        %2083 = vmatprep.subr.mxu0 0.0
        %2084 = vmatpush1.msra.mxu0 0.0
        %2085 = vmatprep.subr.mxu0 0.0
        %2086 = vmatpush1.msra.mxu0 0.0
        %2087 = vmatprep.subr.mxu0 0.0
        %2088 = vmatpush1.msra.mxu0 0.0
        %2089 = vmatprep.subr.mxu0 0.0
        %2090 = vmatpush1.msra.mxu0 0.0
        %2091 = vmatprep.subr.mxu0 0.0
        %2092 = vmatpush1.msra.mxu0 0.0
        %2093 = vmatprep.subr.mxu0 0.0
        %2094 = vmatpush1.msra.mxu0 0.0
        %2095 = vmatprep.subr.mxu0 0.0
        %2096 = vmatpush1.msra.mxu0 0.0
        %2097 = vmatprep.subr.mxu0 0.0
        %2098 = vmatpush1.msra.mxu0 0.0
        %2099 = vmatprep.subr.mxu0 0.0
        %2100 = vmatpush1.msra.mxu0 0.0
        %2101 = vmatprep.subr.mxu0 0.0
        %2102 = vmatpush1.msra.mxu0 0.0
        %2103 = vmatprep.subr.mxu0 0.0
        %2104 = vmatpush1.msra.mxu0 0.0
        %2105 = vmatprep.subr.mxu0 0.0
        %2106 = vmatpush1.msra.mxu0 0.0
        %2107 = vmatprep.subr.mxu0 0.0
        %2108 = vmatpush1.msra.mxu0 %v2030
        %2109 = vmatprep.subr.mxu0 0.0
        %2110 = vmatpush1.msra.mxu0 %v2029
        %2111 = vmatprep.subr.mxu0 0.0
        %2112 = vmatpush2.msra.mxu0 0.0
        %2113 = vmatprep.subr.mxu0 0.0
        %2114 = vmatpush2.msra.mxu0 0.0
        %2115 = vmatprep.subr.mxu0 0.0
        %2116 = vmatpush2.msra.mxu0 0.0
        %2117 = vmatprep.subr.mxu0 0.0
        %2118 = vmatpush2.msra.mxu0 0.0
        %2119 = vmatprep.subr.mxu0 0.0
        %2120 = vmatpush2.msra.mxu0 0.0
        %2121 = vmatprep.subr.mxu0 0.0
        %2122 = vmatpush2.msra.mxu0 0.0
        %2123 = vmatprep.subr.mxu0 0.0
        %2124 = vmatpush2.msra.mxu0 0.0
        %2125 = vmatprep.subr.mxu0 0.0
        %2126 = vmatpush2.msra.mxu0 0.0
        %2127 = vmatprep.subr.mxu0 0.0
        %2128 = vmatpush2.msra.mxu0 0.0
        %2129 = vmatprep.subr.mxu0 0.0
        %2130 = vmatpush2.msra.mxu0 0.0
        %2131 = vmatprep.subr.mxu0 0.0
        %2132 = vmatpush2.msra.mxu0 0.0
        %2133 = vmatprep.subr.mxu0 0.0
        %2134 = vmatpush2.msra.mxu0 0.0
        %2135 = vmatprep.subr.mxu0 0.0
        %2136 = vmatpush2.msra.mxu0 0.0
        %2137 = vmatprep.subr.mxu0 0.0
        %2138 = vmatpush2.msra.mxu0 0.0
        %2139 = vmatprep.subr.mxu0 0.0
        %2140 = vmatpush2.msra.mxu0 0.0
        %2141 = vmatprep.subr.mxu0 0.0
        %2142 = vmatpush2.msra.mxu0 0.0
        %2143 = vmatprep.mubr.f32.mxu0 0.0
        %2144 = vmatmul.mubr.f32.gmra.mxu0 %v2032
        %v2145 = vpop.f32.mrf.mxu0
        %v2146 = vadd.f32 0.0, %v2145
        %v2147 = vpop.f32.mrf.mxu0
        %2148 = vmatprep.mubr.f32.mxu0 0.0
        %2149 = vmatmul.mubr.f32.gmra.mxu0 %v2035
        %v2150 = vpop.f32.mrf.mxu0
        %v2151 = vadd.f32 0.0, %v2150
        %v2152 = vpop.f32.mrf.mxu0
        %2153 = vmatprep.mubr.f32.mxu0 0.0
        %2154 = vmatmul.mubr.f32.gmra.mxu0 %v2038
        %v2155 = vpop.f32.mrf.mxu0
        %v2156 = vadd.f32 0.0, %v2155
        %v2157 = vpop.f32.mrf.mxu0
        %2158 = vmatprep.mubr.f32.mxu0 0.0
        %2159 = vmatmul.mubr.f32.gmra.mxu0 %v2041
        %v2160 = vpop.f32.mrf.mxu0
        %v2161 = vadd.f32 0.0, %v2160
        %v2162 = vpop.f32.mrf.mxu0
        %2163 = vmatprep.mubr.f32.mxu0 0.0
        %2164 = vmatmul.mubr.f32.gmra.mxu0 %v2044
        %v2165 = vpop.f32.mrf.mxu0
        %v2166 = vadd.f32 0.0, %v2165
        %v2167 = vpop.f32.mrf.mxu0
        %2168 = vmatprep.mubr.f32.mxu0 0.0
        %2169 = vmatmul.mubr.f32.gmra.mxu0 %v2047
        %v2170 = vpop.f32.mrf.mxu0
        %v2171 = vadd.f32 0.0, %v2170
        %v2172 = vpop.f32.mrf.mxu0
        %2173 = vmatprep.mubr.f32.mxu0 0.0
        %2174 = vmatmul.mubr.f32.gmra.mxu0 %v2050
        %v2175 = vpop.f32.mrf.mxu0
        %v2176 = vadd.f32 0.0, %v2175
        %v2177 = vpop.f32.mrf.mxu0
        %2178 = vmatprep.mubr.f32.mxu0 0.0
        %2179 = vmatmul.mubr.f32.gmra.mxu0 %v2053
        %v2180 = vpop.f32.mrf.mxu0
        %v2181 = vadd.f32 0.0, %v2180
        %v2182 = vpop.f32.mrf.mxu0
        %2183 = vmatprep.mubr.f32.mxu0 0.0
        %2184 = vmatmul.mubr.f32.gmra.mxu0 %v2056
        %v2185 = vpop.f32.mrf.mxu0
        %v2186 = vadd.f32 0.0, %v2185
        %v2187 = vpop.f32.mrf.mxu0
        %2188 = vmatprep.mubr.f32.mxu0 0.0
        %2189 = vmatmul.mubr.f32.gmra.mxu0 %v2059
        %v2190 = vpop.f32.mrf.mxu0
        %v2191 = vadd.f32 0.0, %v2190
        %v2192 = vpop.f32.mrf.mxu0
        %2193 = vmatprep.mubr.f32.mxu0 0.0
        %2194 = vmatmul.mubr.f32.gmra.mxu0 %v2062
        %v2195 = vpop.f32.mrf.mxu0
        %v2196 = vadd.f32 0.0, %v2195
        %v2197 = vpop.f32.mrf.mxu0
        %2198 = vmatprep.mubr.f32.mxu0 0.0
        %2199 = vmatmul.mubr.f32.gmra.mxu0 %v2065
        %v2200 = vpop.f32.mrf.mxu0
        %v2201 = vadd.f32 0.0, %v2200
        %v2202 = vpop.f32.mrf.mxu0
        %2203 = vmatprep.mubr.f32.mxu0 0.0
        %2204 = vmatmul.mubr.f32.gmra.mxu0 %v2068
        %v2205 = vpop.f32.mrf.mxu0
        %v2206 = vadd.f32 0.0, %v2205
        %v2207 = vpop.f32.mrf.mxu0
        %2208 = vmatprep.mubr.f32.mxu0 0.0
        %2209 = vmatmul.mubr.f32.gmra.mxu0 %v2071
        %v2210 = vpop.f32.mrf.mxu0
        %v2211 = vadd.f32 0.0, %v2210
        %v2212 = vpop.f32.mrf.mxu0
        %2213 = vmatprep.mubr.f32.mxu0 0.0
        %2214 = vmatmul.mubr.f32.gmra.mxu0 %v2074
        %v2215 = vpop.f32.mrf.mxu0
        %v2216 = vadd.f32 0.0, %v2215
        %v2217 = vpop.f32.mrf.mxu0
        %2218 = vmatprep.mubr.f32.mxu0 0.0
        %2219 = vmatmul.mubr.f32.gmra.mxu0 %v2077
        %v2220 = vpop.f32.mrf.mxu0
        %v2221 = vadd.f32 0.0, %v2220
        %v2222 = vpop.f32.mrf.mxu0
        %2223 = vdwg.mxu0
        %v2224 = vadd.f32 %v1996, %v2146
        %v2225 = vadd.f32 %v1997, %v2151
        %v2226 = vadd.f32 %v1998, %v2156
        %v2227 = vadd.f32 %v1999, %v2161
        %v2228 = vadd.f32 %v2000, %v2166
        %v2229 = vadd.f32 %v2001, %v2171
        %v2230 = vadd.f32 %v2002, %v2176
        %v2231 = vadd.f32 %v2003, %v2181
        %v2232 = vadd.f32 %v2004, %v2186
        %v2233 = vadd.f32 %v2005, %v2191
        %v2234 = vadd.f32 %v2006, %v2196
        %v2235 = vadd.f32 %v2007, %v2201
        %v2236 = vadd.f32 %v2008, %v2206
        %v2237 = vadd.f32 %v2009, %v2211
        %v2238 = vadd.f32 %v2010, %v2216
        %v2239 = vadd.f32 %v2011, %v2221
        %v2240 = vld [vmem:[%s2] sm:$0x1]
        %v2242 = vlaneseq
        %v2243 = vshrl.u32 %v2242, 7
        %v2244 = vsub.s32 0, %v2243
        %v2245 = vrot.slane %v2240, %v2244
        %v2247 = vmul.f32 %v2224, %v2245
        %v2248 = vmul.f32 %v2225, %v2245
        %v2249 = vmul.f32 %v2226, %v2245
        %v2250 = vmul.f32 %v2227, %v2245
        %v2251 = vmul.f32 %v2228, %v2245
        %v2252 = vmul.f32 %v2229, %v2245
        %v2253 = vmul.f32 %v2230, %v2245
        %v2254 = vmul.f32 %v2231, %v2245
        %v2255 = vmul.f32 %v2232, %v2245
        %v2256 = vmul.f32 %v2233, %v2245
        %v2257 = vmul.f32 %v2234, %v2245
        %v2258 = vmul.f32 %v2235, %v2245
        %v2259 = vmul.f32 %v2236, %v2245
        %v2260 = vmul.f32 %v2237, %v2245
        %v2261 = vmul.f32 %v2238, %v2245
        %v2262 = vmul.f32 %v2239, %v2245
        %v2263 = vld [vmem:[%s3] sm:$0x1]
        %v2265 = vlaneseq
        %v2266 = vshrl.u32 %v2265, 7
        %v2267 = vsub.s32 0, %v2266
        %v2268 = vrot.slane %v2263, %v2267
        %v2270 = vadd.f32 %v2247, %v2268
        %v2271 = vadd.f32 %v2248, %v2268
        %v2272 = vadd.f32 %v2249, %v2268
        %v2273 = vadd.f32 %v2250, %v2268
        %v2274 = vadd.f32 %v2251, %v2268
        %v2275 = vadd.f32 %v2252, %v2268
        %v2276 = vadd.f32 %v2253, %v2268
        %v2277 = vadd.f32 %v2254, %v2268
        %v2278 = vadd.f32 %v2255, %v2268
        %v2279 = vadd.f32 %v2256, %v2268
        %v2280 = vadd.f32 %v2257, %v2268
        %v2281 = vadd.f32 %v2258, %v2268
        %v2282 = vadd.f32 %v2259, %v2268
        %v2283 = vadd.f32 %v2260, %v2268
        %v2284 = vadd.f32 %v2261, %v2268
        %v2285 = vadd.f32 %v2262, %v2268
        %vm2286 = vcmask 261120
        %2287 = vst.msk [vmem:[%s204] sm:$0xff] %vm2286, %v2270
        %2288 = vst.msk [vmem:[%s204 + $0x8] sm:$0xff] %vm2286, %v2271
        %2289 = vst.msk [vmem:[%s204 + $0x10] sm:$0xff] %vm2286, %v2272
        %2290 = vst.msk [vmem:[%s204 + $0x18] sm:$0xff] %vm2286, %v2273
        %2291 = vst.msk [vmem:[%s204 + $0x20] sm:$0xff] %vm2286, %v2274
        %2292 = vst.msk [vmem:[%s204 + $0x28] sm:$0xff] %vm2286, %v2275
        %2293 = vst.msk [vmem:[%s204 + $0x30] sm:$0xff] %vm2286, %v2276
        %2294 = vst.msk [vmem:[%s204 + $0x38] sm:$0xff] %vm2286, %v2277
        %2295 = vst.msk [vmem:[%s204 + $0x40] sm:$0xff] %vm2286, %v2278
        %2296 = vst.msk [vmem:[%s204 + $0x48] sm:$0xff] %vm2286, %v2279
        %2297 = vst.msk [vmem:[%s204 + $0x50] sm:$0xff] %vm2286, %v2280
        %2298 = vst.msk [vmem:[%s204 + $0x58] sm:$0xff] %vm2286, %v2281
        %2299 = vst.msk [vmem:[%s204 + $0x60] sm:$0xff] %vm2286, %v2282
        %2300 = vst.msk [vmem:[%s204 + $0x68] sm:$0xff] %vm2286, %v2283
        %2301 = vst.msk [vmem:[%s204 + $0x70] sm:$0xff] %vm2286, %v2284
        %2302 = vst.msk [vmem:[%s204 + $0x78] sm:$0xff] %vm2286, %v2285
        %s2303 = sand.u32 %s129, 1
        %s2304 = scalar_lea.sflag [#allocation3], %s2303
        %s2305 = sand.u32 %s129, 1
        %s2306 = smul.addr %s2305, 128
        %s2307 = scalar_lea.vmem [#allocation2], %s2306
        // Predicated region
        $region37: #{tpu_custom_call.1} parent=35 // pred_check
          %p2308 = pneg %p139
        $region38: #{tpu_custom_call.1} parent=35 // pred_check_branch
          %2310 = sbr.rel (%p2308) target = $region40
        $region39: #{tpu_custom_call.1} parent=35 // pred_region
          %s2311 = smul.u32 8, %s23
          %s2313 = ssub.s32 2048, 2048
          %2314 = vsyncadd %s2304, %s2313
          %s2315 = smul.addr %s2311, 2
          %s2316 = smul.addr %s22, 32
          %s2317 = sadd.s32 %s2315, %s2316
          %s2318 = smul.addr %s2317, 128
          %s2319 = scalar_lea.hbm %s4, %s2318
          %s2320 = sshll.u32 %s2307, 4
          %s2321 = int_to_ptr.vmem [resolvable:$true] %s2320
          %2326 = dma.vmem_to_hbm [thread:$0]  %s2321, 2048, %s2319, %s2304, 128, 128, 8
        $region40: #{tpu_custom_call.1} parent=35 // pred_fallthru
          _
      $region36: #{tpu_custom_call.1} parent=5 // pred_fallthru
        _
      %p2327 = scmp.le.s32.totalorder 2, %s13
      // Predicated region
      $region41: #{tpu_custom_call.1} parent=5 // pred_check
        %p2328 = pneg %p2327
      $region42: #{tpu_custom_call.1} parent=5 // pred_check_branch
        %2330 = sbr.rel (%p2328) target = $region44
      $region43: #{tpu_custom_call.1} parent=5 // pred_region
        %s2331 = ssub.s32 %s13, 2
        // Predicated region
        $region45: #{tpu_custom_call.1} parent=43 // pred_check
          %p2332 = pneg %p145
        $region46: #{tpu_custom_call.1} parent=43 // pred_check_branch
          %2334 = sbr.rel (%p2332) target = $region48
        $region47: #{tpu_custom_call.1} parent=43 // pred_region
          %s2335 = sand.u32 %s130, 1
          %s2336 = scalar_lea.sflag [#allocation3], %s2335
          %s2337 = sand.u32 %s130, 1
          %s2338 = smul.addr %s2337, 128
          %s2339 = scalar_lea.vmem [#allocation2], %s2338
          %2340 = dma.done %s2336, 2048
        $region48: #{tpu_custom_call.1} parent=43 // pred_fallthru
          _
      $region44: #{tpu_custom_call.1} parent=5 // pred_fallthru
        _
    $region6: #{tpu_custom_call.1} parent=1 // loop_footer
      %s17 = sadd.s32 1, %s13
    $region7: #{tpu_custom_call.1} parent=1 // loop_footer_branch
      %12 = sbr.rel target = $region3
    $region8: #{tpu_custom_call.1} parent=1 // loop_exit
      _
    %2341 = vsyncpa [#allocation3], 1
    %s2342 = scalar_lea.sflag [#allocation3], 1
    %2343 = vsyncpa %s2342, 1

</llo_original>
